<compile_context>
chip_gen: v7x
topology: tpu7x:2x2x1
jax: 0.10.0
libtpu: 0.0.40
codegen_flags: <defaults>
</compile_context>

<pallas_src>
import functools

import jax
import jax.numpy as jnp
from jax import lax
from jax.experimental import pallas as pl
from jax.experimental.pallas import tpu as pltpu


def _spec(shape, index_map, buffers=None):
    """BlockSpec with an optional explicit buffer count (falls back if unsupported)."""
    if buffers is not None:
        try:
            return pl.BlockSpec(shape, index_map, pipeline_mode=pl.Buffered(buffers))
        except (TypeError, AttributeError):
            pass
    return pl.BlockSpec(shape, index_map)


def _vmem_limit_bytes(default=48 * 1024 * 1024):
    # v5e / v6e have 128 MiB VMEM (use up to ~112 MiB); v7x only 64 MiB (stay ~48 MiB).
    try:
        cap = int(pltpu.get_tpu_info().vmem_capacity_bytes)
    except Exception:
        return default
    return max(default, min(cap - (16 << 20), 112 << 20))


def _encoder_layer_kernel(eps,
                          xq_ref, xkv_ref,
                          wq_ref, bq_ref, wk_ref, bk_ref, wv_ref, bv_ref,
                          wo_ref, bo_ref,
                          w1_ref, b1_ref, w2_ref, b2_ref,
                          g1_ref, be1_ref, g2_ref, be2_ref,
                          out_ref,
                          k_cache, v_cache, acc_ref):
    nhead, _, hd = wq_ref.shape
    nf = w1_ref.shape[0]
    scale = 1.0 / (hd ** 0.5)
    j = pl.program_id(1)                                   # query-tile index

    # ---- cache per-head K / V for this batch element (first q-tile only) ------
    @pl.when(j == 0)
    def _():
        xkv = xkv_ref[0]                                   # (S, D) bf16

        def kv_body(h, carry):
            kh = jnp.dot(xkv, wk_ref[h],
                         preferred_element_type=jnp.float32) + bk_ref[h]
            vh = jnp.dot(xkv, wv_ref[h],
                         preferred_element_type=jnp.float32) + bv_ref[h]
            k_cache[h] = kh.T.astype(jnp.bfloat16)         # (hd, S) pre-transposed once
            v_cache[h] = vh.astype(jnp.bfloat16)           # (S, hd)
            return carry

        lax.fori_loop(0, nhead, kv_body, 0)

    # ---- multi-head self-attention for this query tile ------------------------
    xq = xq_ref[0]                                         # (TQ, D) f32 residual path
    xq_b = xq.astype(jnp.bfloat16)

    acc_ref[...] = jnp.zeros_like(acc_ref)

    def head_body(h, carry):
        qh = jnp.dot(xq_b, wq_ref[h],
                     preferred_element_type=jnp.float32) + bq_ref[h]
        qh = (qh * scale).astype(jnp.bfloat16)             # fold 1/sqrt(hd) into q once
        s = jnp.dot(qh, k_cache[h],
                    preferred_element_type=jnp.float32)    # (TQ, S) lane-dense in S
        s = s - jnp.max(s, axis=-1, keepdims=True)
        p = jnp.exp(s)                                     # f32, EUP
        p = p * pl.reciprocal(jnp.sum(p, axis=-1, keepdims=True), approx=True)
        ho = jnp.dot(p.astype(jnp.bfloat16), v_cache[h],
                     preferred_element_type=jnp.float32)   # (TQ, hd)
        # accumulate the output projection per head (no head concat)
        acc_ref[...] += jnp.dot(ho.astype(jnp.bfloat16), wo_ref[h],
                                preferred_element_type=jnp.float32)
        return carry

    lax.fori_loop(0, nhead, head_body, 0)

    # ---- residual + LayerNorm 1 (f32) ------------------------------------------
    h1 = xq + acc_ref[...] + bo_ref[...]                   # dropout1 = identity
    mu = jnp.mean(h1, axis=-1, keepdims=True)
    var = jnp.mean((h1 - mu) * (h1 - mu), axis=-1, keepdims=True)
    h1 = (h1 - mu) * lax.rsqrt(var + eps) * g1_ref[...] + be1_ref[...]

    # ---- feed-forward, tiled over F (bf16 matmuls, f32 accumulation) ------------
    h1_b = h1.astype(jnp.bfloat16)
    acc_ref[...] = jnp.zeros_like(acc_ref)

    def ff_body(t, carry):
        a = jnp.dot(h1_b, w1_ref[t],
                    preferred_element_type=jnp.float32) + b1_ref[t]
        a = jnp.maximum(a, 0.0).astype(jnp.bfloat16)       # ReLU; dropout = identity
        acc_ref[...] += jnp.dot(a, w2_ref[t],
                                preferred_element_type=jnp.float32)
        return carry

    lax.fori_loop(0, nf, ff_body, 0)
    ff = acc_ref[...] + b2_ref[...]

    # ---- residual + LayerNorm 2 (f32) ------------------------------------------
    h2 = h1 + ff                                           # dropout2 = identity
    mu2 = jnp.mean(h2, axis=-1, keepdims=True)
    var2 = jnp.mean((h2 - mu2) * (h2 - mu2), axis=-1, keepdims=True)
    out_ref[0] = (h2 - mu2) * lax.rsqrt(var2 + eps) * g2_ref[...] + be2_ref[...]


def transformer_encoder_layer(x, params, *, nhead, eps=1e-5, q_tile=None, f_tile=None):
    """x: (B, S, D) float32. params: dict of f32 weights in [in, out] layout."""
    B, S, D = x.shape
    hd = D // nhead
    assert nhead * hd == D, "model_dim must be divisible by nhead"

    if q_tile is None:
        q_tile = S
        for cand in (512, 256, 128, 64, 32, 16, 8):        # prefer the largest tile
            if S % cand == 0:
                q_tile = cand
                break
    assert S % q_tile == 0, "sequence length must be divisible by q_tile"
    nq = S // q_tile

    F = params["w1"].shape[1]
    if f_tile is None:
        f_tile = F
        for cand in (512, 256, 128):                       # bound the ReLU intermediate
            if F % cand == 0:
                f_tile = cand
                break
    assert F % f_tile == 0, "feedforward_dim must be divisible by f_tile"
    nf = F // f_tile

    bf, f32 = jnp.bfloat16, jnp.float32
    # Per-head leading axis for attention weights; FFN weights F-tiled with a leading
    # tile axis.  Matmul weights bf16, biases / LN params f32.
    wq = params["wq"].reshape(D, nhead, hd).transpose(1, 0, 2).astype(bf)    # (H, D, hd)
    wk = params["wk"].reshape(D, nhead, hd).transpose(1, 0, 2).astype(bf)
    wv = params["wv"].reshape(D, nhead, hd).transpose(1, 0, 2).astype(bf)
    bq = params["bq"].reshape(1, nhead, hd).transpose(1, 0, 2).astype(f32)   # (H, 1, hd)
    bk = params["bk"].reshape(1, nhead, hd).transpose(1, 0, 2).astype(f32)
    bv = params["bv"].reshape(1, nhead, hd).transpose(1, 0, 2).astype(f32)
    wo = params["wo"].reshape(nhead, hd, D).astype(bf)                       # (H, hd, D)
    w1 = params["w1"].reshape(D, nf, f_tile).transpose(1, 0, 2).astype(bf)   # (nf, D, ft)
    b1 = params["b1"].reshape(1, nf, f_tile).transpose(1, 0, 2).astype(f32)  # (nf, 1, ft)
    w2 = params["w2"].reshape(nf, f_tile, D).astype(bf)                      # (nf, ft, D)

    param_vals = [wq, bq, wk, bk, wv, bv, wo, params["bo"].astype(f32),
                  w1, b1, w2, params["b2"].astype(f32),
                  params["g1"].astype(f32), params["be1"].astype(f32),
                  params["g2"].astype(f32), params["be2"].astype(f32)]

    def const_spec(arr):
        n = arr.ndim
        # Constant index map -> single buffer: no point double-buffering weights.
        return _spec(arr.shape, lambda b, q, _n=n: (0,) * _n, buffers=1)

    in_specs = [
        # query tile (f32 residual path) - default double-buffering
        pl.BlockSpec((1, q_tile, D), lambda b, q: (b, q, 0)),
        # full sequence for K/V (bf16, only read at q-tile 0) - single buffer
        _spec((1, S, D), lambda b, q: (b, 0, 0), buffers=1),
    ]
    in_specs += [const_spec(p) for p in param_vals]

    kernel = functools.partial(_encoder_layer_kernel, eps)

    return pl.pallas_call(
        kernel,
        out_shape=jax.ShapeDtypeStruct((B, S, D), f32),
        grid_spec=pltpu.PrefetchScalarGridSpec(
            num_scalar_prefetch=0,
            grid=(B, nq),
            in_specs=in_specs,
            out_specs=pl.BlockSpec((1, q_tile, D), lambda b, q: (b, q, 0)),
            scratch_shapes=[pltpu.VMEM((nhead, hd, S), bf),    # K cache (pre-transposed)
                            pltpu.VMEM((nhead, S, hd), bf),    # V cache
                            pltpu.VMEM((q_tile, D), f32)],     # shared attn/FFN accumulator
        ),
        compiler_params=pltpu.CompilerParams(
            dimension_semantics=("parallel", "arbitrary"),
            vmem_limit_bytes=_vmem_limit_bytes()),
    )(x, x.astype(bf), *param_vals)


def init_params(key, model_dim, nhead, feedforward_dim):
    D, F = model_dim, feedforward_dim
    ks = jax.random.split(key, 12)
    s_d = 1.0 / (D ** 0.5)
    s_f = 1.0 / (F ** 0.5)

    def u(k, shape, s):
        return jax.random.uniform(k, shape, jnp.float32, -s, s)

    # Weights stored as [in, out] (transposed vs. PyTorch's [out, in]).
    return {
        "wq": u(ks[0], (D, D), s_d), "bq": u(ks[1], (1, D), s_d),
        "wk": u(ks[2], (D, D), s_d), "bk": u(ks[3], (1, D), s_d),
        "wv": u(ks[4], (D, D), s_d), "bv": u(ks[5], (1, D), s_d),
        "wo": u(ks[6], (D, D), s_d), "bo": u(ks[7], (1, D), s_d),
        "w1": u(ks[8], (D, F), s_d), "b1": u(ks[9], (1, F), s_d),
        "w2": u(ks[10], (F, D), s_f), "b2": u(ks[11], (1, D), s_f),
        "g1": jnp.ones((1, D), jnp.float32), "be1": jnp.zeros((1, D), jnp.float32),
        "g2": jnp.ones((1, D), jnp.float32), "be2": jnp.zeros((1, D), jnp.float32),
    }


def _reference(x, p, nhead, eps=1e-5):
    # Pure-JAX f32 reference for correctness check.
    B, S, D = x.shape
    hd = D // nhead

    def ln(h, g, b):
        mu = jnp.mean(h, -1, keepdims=True)
        var = jnp.mean((h - mu) ** 2, -1, keepdims=True)
        return (h - mu) / jnp.sqrt(var + eps) * g + b

    q = x @ p["wq"] + p["bq"]
    k = x @ p["wk"] + p["bk"]
    v = x @ p["wv"] + p["bv"]
    q = q.reshape(B, S, nhead, hd).transpose(0, 2, 1, 3)
    k = k.reshape(B, S, nhead, hd).transpose(0, 2, 1, 3)
    v = v.reshape(B, S, nhead, hd).transpose(0, 2, 1, 3)
    s = jnp.einsum("bhqd,bhkd->bhqk", q, k) / (hd ** 0.5)
    a = jax.nn.softmax(s, -1)
    o = jnp.einsum("bhqk,bhkd->bhqd", a, v).transpose(0, 2, 1, 3).reshape(B, S, D)
    o = o @ p["wo"] + p["bo"]
    h1 = ln(x + o, p["g1"], p["be1"])
    ff = jnp.maximum(h1 @ p["w1"] + p["b1"], 0.0) @ p["w2"] + p["b2"]
    return ln(h1 + ff, p["g2"], p["be2"])


if __name__ == "__main__":
    B, S, D, H, F = 2, 16, 32, 4, 64
    key = jax.random.PRNGKey(0)
    kx, kp = jax.random.split(key)
    x = jax.random.normal(kx, (B, S, D), jnp.float32)
    params = init_params(kp, D, H, F)

    # q_tile=8 so nq=2, exercising the K/V cache reuse across query tiles.
    out = transformer_encoder_layer(x, params, nhead=H, q_tile=8)
    out = jax.block_until_ready(out)

    ref = _reference(x, params, H)
    assert out.shape == (B, S, D)
    max_err = jnp.max(jnp.abs(out - ref))
    assert jnp.allclose(out, ref, atol=3e-2, rtol=3e-2), f"max abs err {max_err}"
    print("KERNEL_OK")
</pallas_src>

<mosaic_0001>
module attributes {stable_mosaic.version = 11 : i64} {
  func.func @_encoder_layer_kernel(%arg0: i32, %arg1: i32, %arg2: memref<1x8x32xf32, #tpu.memory_space<vmem>>, %arg3: memref<1x16x32xbf16, #tpu.memory_space<vmem>>, %arg4: memref<4x32x8xbf16, #tpu.memory_space<vmem>>, %arg5: memref<4x1x8xf32, #tpu.memory_space<vmem>>, %arg6: memref<4x32x8xbf16, #tpu.memory_space<vmem>>, %arg7: memref<4x1x8xf32, #tpu.memory_space<vmem>>, %arg8: memref<4x32x8xbf16, #tpu.memory_space<vmem>>, %arg9: memref<4x1x8xf32, #tpu.memory_space<vmem>>, %arg10: memref<4x8x32xbf16, #tpu.memory_space<vmem>>, %arg11: memref<1x32xf32, #tpu.memory_space<vmem>>, %arg12: memref<1x32x64xbf16, #tpu.memory_space<vmem>>, %arg13: memref<1x1x64xf32, #tpu.memory_space<vmem>>, %arg14: memref<1x64x32xbf16, #tpu.memory_space<vmem>>, %arg15: memref<1x32xf32, #tpu.memory_space<vmem>>, %arg16: memref<1x32xf32, #tpu.memory_space<vmem>>, %arg17: memref<1x32xf32, #tpu.memory_space<vmem>>, %arg18: memref<1x32xf32, #tpu.memory_space<vmem>>, %arg19: memref<1x32xf32, #tpu.memory_space<vmem>>, %arg20: memref<1x8x32xf32, #tpu.memory_space<vmem>>, %arg21: memref<4x8x16xbf16, #tpu.memory_space<vmem>>, %arg22: memref<4x16x8xbf16, #tpu.memory_space<vmem>>, %arg23: memref<8x32xf32, #tpu.memory_space<vmem>>) attributes {dimension_semantics = [#tpu.dimension_semantics<parallel>, #tpu.dimension_semantics<arbitrary>], iteration_bounds = array<i64: 2, 2>, scalar_prefetch = 0 : i64, scratch_operands = 3 : i64, tpu.core_type = #tpu.core_type<tc>, window_params = [{transform_indices = @transform_0, window_bounds = array<i64: 1, 8, 32>}, {pipeline_mode = #tpu.pipeline_mode<synchronous>, transform_indices = @transform_1, window_bounds = array<i64: 1, 16, 32>}, {pipeline_mode = #tpu.pipeline_mode<synchronous>, transform_indices = @transform_2, window_bounds = array<i64: 4, 32, 8>}, {pipeline_mode = #tpu.pipeline_mode<synchronous>, transform_indices = @transform_3, window_bounds = array<i64: 4, 1, 8>}, {pipeline_mode = #tpu.pipeline_mode<synchronous>, transform_indices = @transform_4, window_bounds = array<i64: 4, 32, 8>}, {pipeline_mode = #tpu.pipeline_mode<synchronous>, transform_indices = @transform_5, window_bounds = array<i64: 4, 1, 8>}, {pipeline_mode = #tpu.pipeline_mode<synchronous>, transform_indices = @transform_6, window_bounds = array<i64: 4, 32, 8>}, {pipeline_mode = #tpu.pipeline_mode<synchronous>, transform_indices = @transform_7, window_bounds = array<i64: 4, 1, 8>}, {pipeline_mode = #tpu.pipeline_mode<synchronous>, transform_indices = @transform_8, window_bounds = array<i64: 4, 8, 32>}, {pipeline_mode = #tpu.pipeline_mode<synchronous>, transform_indices = @transform_9, window_bounds = array<i64: 1, 32>}, {pipeline_mode = #tpu.pipeline_mode<synchronous>, transform_indices = @transform_10, window_bounds = array<i64: 1, 32, 64>}, {pipeline_mode = #tpu.pipeline_mode<synchronous>, transform_indices = @transform_11, window_bounds = array<i64: 1, 1, 64>}, {pipeline_mode = #tpu.pipeline_mode<synchronous>, transform_indices = @transform_12, window_bounds = array<i64: 1, 64, 32>}, {pipeline_mode = #tpu.pipeline_mode<synchronous>, transform_indices = @transform_13, window_bounds = array<i64: 1, 32>}, {pipeline_mode = #tpu.pipeline_mode<synchronous>, transform_indices = @transform_14, window_bounds = array<i64: 1, 32>}, {pipeline_mode = #tpu.pipeline_mode<synchronous>, transform_indices = @transform_15, window_bounds = array<i64: 1, 32>}, {pipeline_mode = #tpu.pipeline_mode<synchronous>, transform_indices = @transform_16, window_bounds = array<i64: 1, 32>}, {pipeline_mode = #tpu.pipeline_mode<synchronous>, transform_indices = @transform_17, window_bounds = array<i64: 1, 32>}, {transform_indices = @transform_18, window_bounds = array<i64: 1, 8, 32>}]} {
    %c0_i32 = arith.constant 0 : i32
    %0 = arith.cmpi eq, %arg1, %c0_i32 : i32
    %1 = arith.extui %0 : i1 to i32
    %c0_i32_0 = arith.constant 0 : i32
    %2 = arith.cmpi ne, %1, %c0_i32_0 : i32
    scf.if %2 {
      %c0_54 = arith.constant 0 : index
      %c0_55 = arith.constant 0 : index
      %c0_56 = arith.constant 0 : index
      %96 = vector.load %arg3[%c0_54, %c0_55, %c0_56] : memref<1x16x32xbf16, #tpu.memory_space<vmem>>, vector<1x16x32xbf16>
      %97 = vector.shape_cast %96 : vector<1x16x32xbf16> to vector<16x32xbf16>
      %c0_i32_57 = arith.constant 0 : i32
      %c4_i32_58 = arith.constant 4 : i32
      %98 = arith.addi %c0_i32_57, %c4_i32_58 : i32
      %c1_i32_59 = arith.constant 1 : i32
      scf.for %arg24 = %c0_i32_57 to %98 step %c1_i32_59  : i32 {
        %99 = arith.index_cast %arg24 : i32 to index
        %c0_61 = arith.constant 0 : index
        %c0_62 = arith.constant 0 : index
        %100 = vector.load %arg6[%99, %c0_61, %c0_62] : memref<4x32x8xbf16, #tpu.memory_space<vmem>>, vector<1x32x8xbf16>
        %101 = vector.shape_cast %100 : vector<1x32x8xbf16> to vector<32x8xbf16>
        %cst_63 = arith.constant dense<0.000000e+00> : vector<16x8xf32>
        %102 = tpu.matmul %97, %101, %cst_63 {dimension_numbers = #tpu.dot_dimension_numbers<[1], [0], [0], [1], [0, 0, 1, 1], [], []>} : vector<16x32xbf16>, vector<32x8xbf16>, vector<16x8xf32> -> vector<16x8xf32>
        %103 = arith.index_cast %arg24 : i32 to index
        %c0_64 = arith.constant 0 : index
        %c0_65 = arith.constant 0 : index
        %104 = vector.load %arg7[%103, %c0_64, %c0_65] : memref<4x1x8xf32, #tpu.memory_space<vmem>>, vector<1x1x8xf32>
        %105 = vector.shape_cast %104 : vector<1x1x8xf32> to vector<1x8xf32>
        %106 = vector.broadcast %105 : vector<1x8xf32> to vector<16x8xf32>
        %107 = arith.addf %102, %106 : vector<16x8xf32>
        %108 = arith.index_cast %arg24 : i32 to index
        %c0_66 = arith.constant 0 : index
        %c0_67 = arith.constant 0 : index
        %109 = vector.load %arg8[%108, %c0_66, %c0_67] : memref<4x32x8xbf16, #tpu.memory_space<vmem>>, vector<1x32x8xbf16>
        %110 = vector.shape_cast %109 : vector<1x32x8xbf16> to vector<32x8xbf16>
        %cst_68 = arith.constant dense<0.000000e+00> : vector<16x8xf32>
        %111 = tpu.matmul %97, %110, %cst_68 {dimension_numbers = #tpu.dot_dimension_numbers<[1], [0], [0], [1], [0, 0, 1, 1], [], []>} : vector<16x32xbf16>, vector<32x8xbf16>, vector<16x8xf32> -> vector<16x8xf32>
        %112 = arith.index_cast %arg24 : i32 to index
        %c0_69 = arith.constant 0 : index
        %c0_70 = arith.constant 0 : index
        %113 = vector.load %arg9[%112, %c0_69, %c0_70] : memref<4x1x8xf32, #tpu.memory_space<vmem>>, vector<1x1x8xf32>
        %114 = vector.shape_cast %113 : vector<1x1x8xf32> to vector<1x8xf32>
        %115 = vector.broadcast %114 : vector<1x8xf32> to vector<16x8xf32>
        %116 = arith.addf %111, %115 : vector<16x8xf32>
        %117 = tpu.transpose %107, [1, 0] : vector<16x8xf32> -> vector<8x16xf32>
        %118 = arith.truncf %117 : vector<8x16xf32> to vector<8x16xbf16>
        %119 = arith.index_cast %arg24 : i32 to index
        %c0_71 = arith.constant 0 : index
        %c0_72 = arith.constant 0 : index
        %120 = vector.load %arg21[%119, %c0_71, %c0_72] : memref<4x8x16xbf16, #tpu.memory_space<vmem>>, vector<1x8x16xbf16>
        %121 = vector.shape_cast %120 : vector<1x8x16xbf16> to vector<8x16xbf16>
        %122 = vector.shape_cast %118 : vector<8x16xbf16> to vector<1x8x16xbf16>
        tpu.vector_store %arg21[%119, %c0_71, %c0_72], %122 {strides = array<i32>} : memref<4x8x16xbf16, #tpu.memory_space<vmem>>, vector<1x8x16xbf16>,
        %123 = arith.truncf %116 : vector<16x8xf32> to vector<16x8xbf16>
        %124 = arith.index_cast %arg24 : i32 to index
        %c0_73 = arith.constant 0 : index
        %c0_74 = arith.constant 0 : index
        %125 = vector.load %arg22[%124, %c0_73, %c0_74] : memref<4x16x8xbf16, #tpu.memory_space<vmem>>, vector<1x16x8xbf16>
        %126 = vector.shape_cast %125 : vector<1x16x8xbf16> to vector<16x8xbf16>
        %127 = vector.shape_cast %123 : vector<16x8xbf16> to vector<1x16x8xbf16>
        tpu.vector_store %arg22[%124, %c0_73, %c0_74], %127 {strides = array<i32>} : memref<4x16x8xbf16, #tpu.memory_space<vmem>>, vector<1x16x8xbf16>,
      }
      %c4_i32_60 = arith.constant 4 : i32
    } else {
    }
    %c0 = arith.constant 0 : index
    %c0_1 = arith.constant 0 : index
    %c0_2 = arith.constant 0 : index
    %3 = vector.load %arg2[%c0, %c0_1, %c0_2] : memref<1x8x32xf32, #tpu.memory_space<vmem>>, vector<1x8x32xf32>
    %4 = vector.shape_cast %3 : vector<1x8x32xf32> to vector<8x32xf32>
    %5 = arith.truncf %4 : vector<8x32xf32> to vector<8x32xbf16>
    %cst = arith.constant 0.000000e+00 : f32
    %6 = vector.broadcast %cst : f32 to vector<8x32xf32>
    %c0_3 = arith.constant 0 : index
    %c0_4 = arith.constant 0 : index
    %7 = vector.load %arg23[%c0_3, %c0_4] : memref<8x32xf32, #tpu.memory_space<vmem>>, vector<8x32xf32>
    tpu.vector_store %arg23[%c0_3, %c0_4], %6 {strides = array<i32>} : memref<8x32xf32, #tpu.memory_space<vmem>>, vector<8x32xf32>,
    %c0_i32_5 = arith.constant 0 : i32
    %c4_i32 = arith.constant 4 : i32
    %8 = arith.addi %c0_i32_5, %c4_i32 : i32
    %c1_i32 = arith.constant 1 : i32
    scf.for %arg24 = %c0_i32_5 to %8 step %c1_i32  : i32 {
      %96 = arith.index_cast %arg24 : i32 to index
      %c0_54 = arith.constant 0 : index
      %c0_55 = arith.constant 0 : index
      %97 = vector.load %arg4[%96, %c0_54, %c0_55] : memref<4x32x8xbf16, #tpu.memory_space<vmem>>, vector<1x32x8xbf16>
      %98 = vector.shape_cast %97 : vector<1x32x8xbf16> to vector<32x8xbf16>
      %cst_56 = arith.constant dense<0.000000e+00> : vector<8x8xf32>
      %99 = tpu.matmul %5, %98, %cst_56 {dimension_numbers = #tpu.dot_dimension_numbers<[1], [0], [0], [1], [0, 0, 1, 1], [], []>} : vector<8x32xbf16>, vector<32x8xbf16>, vector<8x8xf32> -> vector<8x8xf32>
      %100 = arith.index_cast %arg24 : i32 to index
      %c0_57 = arith.constant 0 : index
      %c0_58 = arith.constant 0 : index
      %101 = vector.load %arg5[%100, %c0_57, %c0_58] : memref<4x1x8xf32, #tpu.memory_space<vmem>>, vector<1x1x8xf32>
      %102 = vector.shape_cast %101 : vector<1x1x8xf32> to vector<1x8xf32>
      %103 = vector.broadcast %102 : vector<1x8xf32> to vector<8x8xf32>
      %104 = arith.addf %99, %103 : vector<8x8xf32>
      %cst_59 = arith.constant 0.353553385 : f32
      %105 = vector.broadcast %cst_59 : f32 to vector<8x8xf32>
      %106 = arith.mulf %104, %105 : vector<8x8xf32>
      %107 = arith.truncf %106 : vector<8x8xf32> to vector<8x8xbf16>
      %108 = arith.index_cast %arg24 : i32 to index
      %c0_60 = arith.constant 0 : index
      %c0_61 = arith.constant 0 : index
      %109 = vector.load %arg21[%108, %c0_60, %c0_61] : memref<4x8x16xbf16, #tpu.memory_space<vmem>>, vector<1x8x16xbf16>
      %110 = vector.shape_cast %109 : vector<1x8x16xbf16> to vector<8x16xbf16>
      %cst_62 = arith.constant dense<0.000000e+00> : vector<8x16xf32>
      %111 = tpu.matmul %107, %110, %cst_62 {dimension_numbers = #tpu.dot_dimension_numbers<[1], [0], [0], [1], [0, 0, 1, 1], [], []>} : vector<8x8xbf16>, vector<8x16xbf16>, vector<8x16xf32> -> vector<8x16xf32>
      %cst_63 = arith.constant dense<0xFF800000> : vector<8xf32>
      %112 = vector.multi_reduction <maximumf>, %111, %cst_63 [1] : vector<8x16xf32> to vector<8xf32>
      %113 = vector.shape_cast %112 : vector<8xf32> to vector<8x1xf32>
      %114 = vector.broadcast %113 : vector<8x1xf32> to vector<8x16xf32>
      %115 = arith.subf %111, %114 : vector<8x16xf32>
      %116 = math.exp %115 : vector<8x16xf32>
      %cst_64 = arith.constant dense<0.000000e+00> : vector<8xf32>
      %117 = vector.multi_reduction <add>, %116, %cst_64 [1] : vector<8x16xf32> to vector<8xf32>
      %118 = vector.shape_cast %117 : vector<8xf32> to vector<8x1xf32>
      %119 = tpu.reciprocal %118 {approx = true} : vector<8x1xf32> -> vector<8x1xf32>
      %120 = vector.broadcast %119 : vector<8x1xf32> to vector<8x16xf32>
      %121 = arith.mulf %116, %120 : vector<8x16xf32>
      %122 = arith.truncf %121 : vector<8x16xf32> to vector<8x16xbf16>
      %123 = arith.index_cast %arg24 : i32 to index
      %c0_65 = arith.constant 0 : index
      %c0_66 = arith.constant 0 : index
      %124 = vector.load %arg22[%123, %c0_65, %c0_66] : memref<4x16x8xbf16, #tpu.memory_space<vmem>>, vector<1x16x8xbf16>
      %125 = vector.shape_cast %124 : vector<1x16x8xbf16> to vector<16x8xbf16>
      %cst_67 = arith.constant dense<0.000000e+00> : vector<8x8xf32>
      %126 = tpu.matmul %122, %125, %cst_67 {dimension_numbers = #tpu.dot_dimension_numbers<[1], [0], [0], [1], [0, 0, 1, 1], [], []>} : vector<8x16xbf16>, vector<16x8xbf16>, vector<8x8xf32> -> vector<8x8xf32>
      %c0_68 = arith.constant 0 : index
      %c0_69 = arith.constant 0 : index
      %127 = vector.load %arg23[%c0_68, %c0_69] : memref<8x32xf32, #tpu.memory_space<vmem>>, vector<8x32xf32>
      %128 = arith.truncf %126 : vector<8x8xf32> to vector<8x8xbf16>
      %129 = arith.index_cast %arg24 : i32 to index
      %c0_70 = arith.constant 0 : index
      %c0_71 = arith.constant 0 : index
      %130 = vector.load %arg10[%129, %c0_70, %c0_71] : memref<4x8x32xbf16, #tpu.memory_space<vmem>>, vector<1x8x32xbf16>
      %131 = vector.shape_cast %130 : vector<1x8x32xbf16> to vector<8x32xbf16>
      %cst_72 = arith.constant dense<0.000000e+00> : vector<8x32xf32>
      %132 = tpu.matmul %128, %131, %cst_72 {dimension_numbers = #tpu.dot_dimension_numbers<[1], [0], [0], [1], [0, 0, 1, 1], [], []>} : vector<8x8xbf16>, vector<8x32xbf16>, vector<8x32xf32> -> vector<8x32xf32>
      %133 = arith.addf %127, %132 : vector<8x32xf32>
      %c0_73 = arith.constant 0 : index
      %c0_74 = arith.constant 0 : index
      %134 = vector.load %arg23[%c0_73, %c0_74] : memref<8x32xf32, #tpu.memory_space<vmem>>, vector<8x32xf32>
      tpu.vector_store %arg23[%c0_73, %c0_74], %133 {strides = array<i32>} : memref<8x32xf32, #tpu.memory_space<vmem>>, vector<8x32xf32>,
    }
    %c4_i32_6 = arith.constant 4 : i32
    %c0_7 = arith.constant 0 : index
    %c0_8 = arith.constant 0 : index
    %9 = vector.load %arg23[%c0_7, %c0_8] : memref<8x32xf32, #tpu.memory_space<vmem>>, vector<8x32xf32>
    %10 = arith.addf %4, %9 : vector<8x32xf32>
    %c0_9 = arith.constant 0 : index
    %c0_10 = arith.constant 0 : index
    %11 = vector.load %arg11[%c0_9, %c0_10] : memref<1x32xf32, #tpu.memory_space<vmem>>, vector<1x32xf32>
    %12 = vector.broadcast %11 : vector<1x32xf32> to vector<8x32xf32>
    %13 = arith.addf %10, %12 : vector<8x32xf32>
    %cst_11 = arith.constant dense<0.000000e+00> : vector<8xf32>
    %14 = vector.multi_reduction <add>, %13, %cst_11 [1] : vector<8x32xf32> to vector<8xf32>
    %15 = vector.shape_cast %14 : vector<8xf32> to vector<8x1xf32>
    %cst_12 = arith.constant 3.200000e+01 : f32
    %16 = vector.broadcast %cst_12 : f32 to vector<8x1xf32>
    %17 = arith.divf %15, %16 : vector<8x1xf32>
    %18 = vector.broadcast %17 : vector<8x1xf32> to vector<8x32xf32>
    %19 = arith.subf %13, %18 : vector<8x32xf32>
    %20 = vector.broadcast %17 : vector<8x1xf32> to vector<8x32xf32>
    %21 = arith.subf %13, %20 : vector<8x32xf32>
    %22 = arith.mulf %19, %21 : vector<8x32xf32>
    %cst_13 = arith.constant dense<0.000000e+00> : vector<8xf32>
    %23 = vector.multi_reduction <add>, %22, %cst_13 [1] : vector<8x32xf32> to vector<8xf32>
    %24 = vector.shape_cast %23 : vector<8xf32> to vector<8x1xf32>
    %cst_14 = arith.constant 3.200000e+01 : f32
    %25 = vector.broadcast %cst_14 : f32 to vector<8x1xf32>
    %26 = arith.divf %24, %25 : vector<8x1xf32>
    %27 = vector.broadcast %17 : vector<8x1xf32> to vector<8x32xf32>
    %28 = arith.subf %13, %27 : vector<8x32xf32>
    %cst_15 = arith.constant 9.99999974E-6 : f32
    %29 = vector.broadcast %cst_15 : f32 to vector<8x1xf32>
    %30 = arith.addf %26, %29 : vector<8x1xf32>
    %31 = math.rsqrt %30 : vector<8x1xf32>
    %32 = vector.broadcast %31 : vector<8x1xf32> to vector<8x32xf32>
    %33 = arith.mulf %28, %32 : vector<8x32xf32>
    %c0_16 = arith.constant 0 : index
    %c0_17 = arith.constant 0 : index
    %34 = vector.load %arg16[%c0_16, %c0_17] : memref<1x32xf32, #tpu.memory_space<vmem>>, vector<1x32xf32>
    %35 = vector.broadcast %34 : vector<1x32xf32> to vector<8x32xf32>
    %36 = arith.mulf %33, %35 : vector<8x32xf32>
    %c0_18 = arith.constant 0 : index
    %c0_19 = arith.constant 0 : index
    %37 = vector.load %arg17[%c0_18, %c0_19] : memref<1x32xf32, #tpu.memory_space<vmem>>, vector<1x32xf32>
    %38 = vector.broadcast %37 : vector<1x32xf32> to vector<8x32xf32>
    %39 = arith.addf %36, %38 : vector<8x32xf32>
    %40 = arith.truncf %39 : vector<8x32xf32> to vector<8x32xbf16>
    %cst_20 = arith.constant 0.000000e+00 : f32
    %41 = vector.broadcast %cst_20 : f32 to vector<8x32xf32>
    %c0_21 = arith.constant 0 : index
    %c0_22 = arith.constant 0 : index
    %42 = vector.load %arg23[%c0_21, %c0_22] : memref<8x32xf32, #tpu.memory_space<vmem>>, vector<8x32xf32>
    tpu.vector_store %arg23[%c0_21, %c0_22], %41 {strides = array<i32>} : memref<8x32xf32, #tpu.memory_space<vmem>>, vector<8x32xf32>,
    %c0_i32_23 = arith.constant 0 : i32
    %43 = arith.index_cast %c0_i32_23 : i32 to index
    %c0_24 = arith.constant 0 : index
    %c0_25 = arith.constant 0 : index
    %44 = vector.load %arg12[%43, %c0_24, %c0_25] : memref<1x32x64xbf16, #tpu.memory_space<vmem>>, vector<1x32x64xbf16>
    %45 = vector.shape_cast %44 : vector<1x32x64xbf16> to vector<32x64xbf16>
    %cst_26 = arith.constant dense<0.000000e+00> : vector<8x64xf32>
    %46 = tpu.matmul %40, %45, %cst_26 {dimension_numbers = #tpu.dot_dimension_numbers<[1], [0], [0], [1], [0, 0, 1, 1], [], []>} : vector<8x32xbf16>, vector<32x64xbf16>, vector<8x64xf32> -> vector<8x64xf32>
    %47 = arith.index_cast %c0_i32_23 : i32 to index
    %c0_27 = arith.constant 0 : index
    %c0_28 = arith.constant 0 : index
    %48 = vector.load %arg13[%47, %c0_27, %c0_28] : memref<1x1x64xf32, #tpu.memory_space<vmem>>, vector<1x1x64xf32>
    %49 = vector.shape_cast %48 : vector<1x1x64xf32> to vector<1x64xf32>
    %50 = vector.broadcast %49 : vector<1x64xf32> to vector<8x64xf32>
    %51 = arith.addf %46, %50 : vector<8x64xf32>
    %cst_29 = arith.constant 0.000000e+00 : f32
    %52 = vector.broadcast %cst_29 : f32 to vector<8x64xf32>
    %53 = arith.maximumf %51, %52 : vector<8x64xf32>
    %54 = arith.truncf %53 : vector<8x64xf32> to vector<8x64xbf16>
    %c0_30 = arith.constant 0 : index
    %c0_31 = arith.constant 0 : index
    %55 = vector.load %arg23[%c0_30, %c0_31] : memref<8x32xf32, #tpu.memory_space<vmem>>, vector<8x32xf32>
    %56 = arith.index_cast %c0_i32_23 : i32 to index
    %c0_32 = arith.constant 0 : index
    %c0_33 = arith.constant 0 : index
    %57 = vector.load %arg14[%56, %c0_32, %c0_33] : memref<1x64x32xbf16, #tpu.memory_space<vmem>>, vector<1x64x32xbf16>
    %58 = vector.shape_cast %57 : vector<1x64x32xbf16> to vector<64x32xbf16>
    %cst_34 = arith.constant dense<0.000000e+00> : vector<8x32xf32>
    %59 = tpu.matmul %54, %58, %cst_34 {dimension_numbers = #tpu.dot_dimension_numbers<[1], [0], [0], [1], [0, 0, 1, 1], [], []>} : vector<8x64xbf16>, vector<64x32xbf16>, vector<8x32xf32> -> vector<8x32xf32>
    %60 = arith.addf %55, %59 : vector<8x32xf32>
    %c0_35 = arith.constant 0 : index
    %c0_36 = arith.constant 0 : index
    %61 = vector.load %arg23[%c0_35, %c0_36] : memref<8x32xf32, #tpu.memory_space<vmem>>, vector<8x32xf32>
    tpu.vector_store %arg23[%c0_35, %c0_36], %60 {strides = array<i32>} : memref<8x32xf32, #tpu.memory_space<vmem>>, vector<8x32xf32>,
    %c1_i32_37 = arith.constant 1 : i32
    %c0_38 = arith.constant 0 : index
    %c0_39 = arith.constant 0 : index
    %62 = vector.load %arg23[%c0_38, %c0_39] : memref<8x32xf32, #tpu.memory_space<vmem>>, vector<8x32xf32>
    %c0_40 = arith.constant 0 : index
    %c0_41 = arith.constant 0 : index
    %63 = vector.load %arg15[%c0_40, %c0_41] : memref<1x32xf32, #tpu.memory_space<vmem>>, vector<1x32xf32>
    %64 = vector.broadcast %63 : vector<1x32xf32> to vector<8x32xf32>
    %65 = arith.addf %62, %64 : vector<8x32xf32>
    %66 = arith.addf %39, %65 : vector<8x32xf32>
    %cst_42 = arith.constant dense<0.000000e+00> : vector<8xf32>
    %67 = vector.multi_reduction <add>, %66, %cst_42 [1] : vector<8x32xf32> to vector<8xf32>
    %68 = vector.shape_cast %67 : vector<8xf32> to vector<8x1xf32>
    %cst_43 = arith.constant 3.200000e+01 : f32
    %69 = vector.broadcast %cst_43 : f32 to vector<8x1xf32>
    %70 = arith.divf %68, %69 : vector<8x1xf32>
    %71 = vector.broadcast %70 : vector<8x1xf32> to vector<8x32xf32>
    %72 = arith.subf %66, %71 : vector<8x32xf32>
    %73 = vector.broadcast %70 : vector<8x1xf32> to vector<8x32xf32>
    %74 = arith.subf %66, %73 : vector<8x32xf32>
    %75 = arith.mulf %72, %74 : vector<8x32xf32>
    %cst_44 = arith.constant dense<0.000000e+00> : vector<8xf32>
    %76 = vector.multi_reduction <add>, %75, %cst_44 [1] : vector<8x32xf32> to vector<8xf32>
    %77 = vector.shape_cast %76 : vector<8xf32> to vector<8x1xf32>
    %cst_45 = arith.constant 3.200000e+01 : f32
    %78 = vector.broadcast %cst_45 : f32 to vector<8x1xf32>
    %79 = arith.divf %77, %78 : vector<8x1xf32>
    %80 = vector.broadcast %70 : vector<8x1xf32> to vector<8x32xf32>
    %81 = arith.subf %66, %80 : vector<8x32xf32>
    %cst_46 = arith.constant 9.99999974E-6 : f32
    %82 = vector.broadcast %cst_46 : f32 to vector<8x1xf32>
    %83 = arith.addf %79, %82 : vector<8x1xf32>
    %84 = math.rsqrt %83 : vector<8x1xf32>
    %85 = vector.broadcast %84 : vector<8x1xf32> to vector<8x32xf32>
    %86 = arith.mulf %81, %85 : vector<8x32xf32>
    %c0_47 = arith.constant 0 : index
    %c0_48 = arith.constant 0 : index
    %87 = vector.load %arg18[%c0_47, %c0_48] : memref<1x32xf32, #tpu.memory_space<vmem>>, vector<1x32xf32>
    %88 = vector.broadcast %87 : vector<1x32xf32> to vector<8x32xf32>
    %89 = arith.mulf %86, %88 : vector<8x32xf32>
    %c0_49 = arith.constant 0 : index
    %c0_50 = arith.constant 0 : index
    %90 = vector.load %arg19[%c0_49, %c0_50] : memref<1x32xf32, #tpu.memory_space<vmem>>, vector<1x32xf32>
    %91 = vector.broadcast %90 : vector<1x32xf32> to vector<8x32xf32>
    %92 = arith.addf %89, %91 : vector<8x32xf32>
    %c0_51 = arith.constant 0 : index
    %c0_52 = arith.constant 0 : index
    %c0_53 = arith.constant 0 : index
    %93 = vector.load %arg20[%c0_51, %c0_52, %c0_53] : memref<1x8x32xf32, #tpu.memory_space<vmem>>, vector<1x8x32xf32>
    %94 = vector.shape_cast %93 : vector<1x8x32xf32> to vector<8x32xf32>
    %95 = vector.shape_cast %92 : vector<8x32xf32> to vector<1x8x32xf32>
    tpu.vector_store %arg20[%c0_51, %c0_52, %c0_53], %95 {strides = array<i32>} : memref<1x8x32xf32, #tpu.memory_space<vmem>>, vector<1x8x32xf32>,
    return
  }
  func.func @transform_0(%arg0: i32, %arg1: i32) -> (i32, i32, i32) {
    %c0_i32 = arith.constant 0 : i32
    %c0_i32_0 = arith.constant 0 : i32
    return %arg0, %arg1, %c0_i32 : i32, i32, i32
  }
  func.func @transform_1(%arg0: i32, %arg1: i32) -> (i32, i32, i32) {
    %c0_i32 = arith.constant 0 : i32
    %c0_i32_0 = arith.constant 0 : i32
    %c0_i32_1 = arith.constant 0 : i32
    return %arg0, %c0_i32, %c0_i32_0 : i32, i32, i32
  }
  func.func @transform_2(%arg0: i32, %arg1: i32) -> (i32, i32, i32) {
    %c0_i32 = arith.constant 0 : i32
    %c0_i32_0 = arith.constant 0 : i32
    %c0_i32_1 = arith.constant 0 : i32
    %c0_i32_2 = arith.constant 0 : i32
    return %c0_i32, %c0_i32_0, %c0_i32_1 : i32, i32, i32
  }
  func.func @transform_3(%arg0: i32, %arg1: i32) -> (i32, i32, i32) {
    %c0_i32 = arith.constant 0 : i32
    %c0_i32_0 = arith.constant 0 : i32
    %c0_i32_1 = arith.constant 0 : i32
    %c0_i32_2 = arith.constant 0 : i32
    return %c0_i32, %c0_i32_0, %c0_i32_1 : i32, i32, i32
  }
  func.func @transform_4(%arg0: i32, %arg1: i32) -> (i32, i32, i32) {
    %c0_i32 = arith.constant 0 : i32
    %c0_i32_0 = arith.constant 0 : i32
    %c0_i32_1 = arith.constant 0 : i32
    %c0_i32_2 = arith.constant 0 : i32
    return %c0_i32, %c0_i32_0, %c0_i32_1 : i32, i32, i32
  }
  func.func @transform_5(%arg0: i32, %arg1: i32) -> (i32, i32, i32) {
    %c0_i32 = arith.constant 0 : i32
    %c0_i32_0 = arith.constant 0 : i32
    %c0_i32_1 = arith.constant 0 : i32
    %c0_i32_2 = arith.constant 0 : i32
    return %c0_i32, %c0_i32_0, %c0_i32_1 : i32, i32, i32
  }
  func.func @transform_6(%arg0: i32, %arg1: i32) -> (i32, i32, i32) {
    %c0_i32 = arith.constant 0 : i32
    %c0_i32_0 = arith.constant 0 : i32
    %c0_i32_1 = arith.constant 0 : i32
    %c0_i32_2 = arith.constant 0 : i32
    return %c0_i32, %c0_i32_0, %c0_i32_1 : i32, i32, i32
  }
  func.func @transform_7(%arg0: i32, %arg1: i32) -> (i32, i32, i32) {
    %c0_i32 = arith.constant 0 : i32
    %c0_i32_0 = arith.constant 0 : i32
    %c0_i32_1 = arith.constant 0 : i32
    %c0_i32_2 = arith.constant 0 : i32
    return %c0_i32, %c0_i32_0, %c0_i32_1 : i32, i32, i32
  }
  func.func @transform_8(%arg0: i32, %arg1: i32) -> (i32, i32, i32) {
    %c0_i32 = arith.constant 0 : i32
    %c0_i32_0 = arith.constant 0 : i32
    %c0_i32_1 = arith.constant 0 : i32
    %c0_i32_2 = arith.constant 0 : i32
    return %c0_i32, %c0_i32_0, %c0_i32_1 : i32, i32, i32
  }
  func.func @transform_9(%arg0: i32, %arg1: i32) -> (i32, i32) {
    %c0_i32 = arith.constant 0 : i32
    %c0_i32_0 = arith.constant 0 : i32
    %c0_i32_1 = arith.constant 0 : i32
    return %c0_i32, %c0_i32_0 : i32, i32
  }
  func.func @transform_10(%arg0: i32, %arg1: i32) -> (i32, i32, i32) {
    %c0_i32 = arith.constant 0 : i32
    %c0_i32_0 = arith.constant 0 : i32
    %c0_i32_1 = arith.constant 0 : i32
    %c0_i32_2 = arith.constant 0 : i32
    return %c0_i32, %c0_i32_0, %c0_i32_1 : i32, i32, i32
  }
  func.func @transform_11(%arg0: i32, %arg1: i32) -> (i32, i32, i32) {
    %c0_i32 = arith.constant 0 : i32
    %c0_i32_0 = arith.constant 0 : i32
    %c0_i32_1 = arith.constant 0 : i32
    %c0_i32_2 = arith.constant 0 : i32
    return %c0_i32, %c0_i32_0, %c0_i32_1 : i32, i32, i32
  }
  func.func @transform_12(%arg0: i32, %arg1: i32) -> (i32, i32, i32) {
    %c0_i32 = arith.constant 0 : i32
    %c0_i32_0 = arith.constant 0 : i32
    %c0_i32_1 = arith.constant 0 : i32
    %c0_i32_2 = arith.constant 0 : i32
    return %c0_i32, %c0_i32_0, %c0_i32_1 : i32, i32, i32
  }
  func.func @transform_13(%arg0: i32, %arg1: i32) -> (i32, i32) {
    %c0_i32 = arith.constant 0 : i32
    %c0_i32_0 = arith.constant 0 : i32
    %c0_i32_1 = arith.constant 0 : i32
    return %c0_i32, %c0_i32_0 : i32, i32
  }
  func.func @transform_14(%arg0: i32, %arg1: i32) -> (i32, i32) {
    %c0_i32 = arith.constant 0 : i32
    %c0_i32_0 = arith.constant 0 : i32
    %c0_i32_1 = arith.constant 0 : i32
    return %c0_i32, %c0_i32_0 : i32, i32
  }
  func.func @transform_15(%arg0: i32, %arg1: i32) -> (i32, i32) {
    %c0_i32 = arith.constant 0 : i32
    %c0_i32_0 = arith.constant 0 : i32
    %c0_i32_1 = arith.constant 0 : i32
    return %c0_i32, %c0_i32_0 : i32, i32
  }
  func.func @transform_16(%arg0: i32, %arg1: i32) -> (i32, i32) {
    %c0_i32 = arith.constant 0 : i32
    %c0_i32_0 = arith.constant 0 : i32
    %c0_i32_1 = arith.constant 0 : i32
    return %c0_i32, %c0_i32_0 : i32, i32
  }
  func.func @transform_17(%arg0: i32, %arg1: i32) -> (i32, i32) {
    %c0_i32 = arith.constant 0 : i32
    %c0_i32_0 = arith.constant 0 : i32
    %c0_i32_1 = arith.constant 0 : i32
    return %c0_i32, %c0_i32_0 : i32, i32
  }
  func.func @transform_18(%arg0: i32, %arg1: i32) -> (i32, i32, i32) {
    %c0_i32 = arith.constant 0 : i32
    %c0_i32_0 = arith.constant 0 : i32
    return %arg0, %arg1, %c0_i32 : i32, i32, i32
  }
}

</mosaic_0001>

<llo_original>
// kernel: tpu_custom_call.1
$region0: #{tpu_custom_call.1}
  #allocation0 [shape = 'u32[]', space=smem, size = 0x4, offset = 0x4, fixed_abs, tag = 'smem constant byte address 0x4 - core index']
  #allocation1 [shape = 'u32[144,128]{1,0:T(1,128)}', space=vmem, size = 0x12000, scoped, tag = 'internal scratch']
  #allocation2 [shape = 'bf16[4,8,16]{2,1,0:T(8,128)(2,1)}', space=vmem, size = 0x2000, scoped, tag = 'scratch operand']
  #allocation3 [shape = 'bf16[4,16,8]{2,1,0:T(16,128)(2,1)}', space=vmem, size = 0x4000, scoped, tag = 'scratch operand']
  #allocation4 [shape = 'f32[8,32]{1,0:T(8,128)}', space=vmem, size = 0x1000, scoped, tag = 'scratch operand']
  %s0 = inlined_call_operand.vmem [shape: f32[2,16,32], index: 0, kind: input, shape index: {}]
  %s1 = inlined_call_operand.vmem [shape: bf16[2,16,32], index: 1, kind: input, shape index: {}]
  %s2 = inlined_call_operand.vmem [shape: bf16[4,32,8], index: 2, kind: input, shape index: {}]
  %s3 = inlined_call_operand.vmem [shape: f32[4,1,8], index: 3, kind: input, shape index: {}]
  %s4 = inlined_call_operand.vmem [shape: bf16[4,32,8], index: 4, kind: input, shape index: {}]
  %s5 = inlined_call_operand.vmem [shape: f32[4,1,8], index: 5, kind: input, shape index: {}]
  %s6 = inlined_call_operand.vmem [shape: bf16[4,32,8], index: 6, kind: input, shape index: {}]
  %s7 = inlined_call_operand.vmem [shape: f32[4,1,8], index: 7, kind: input, shape index: {}]
  %s8 = inlined_call_operand.vmem [shape: bf16[4,8,32], index: 8, kind: input, shape index: {}]
  %s9 = inlined_call_operand.vmem [shape: f32[1,32], index: 9, kind: input, shape index: {}]
  %s10 = inlined_call_operand.vmem [shape: bf16[1,32,64], index: 10, kind: input, shape index: {}]
  %s11 = inlined_call_operand.vmem [shape: f32[1,1,64], index: 11, kind: input, shape index: {}]
  %s12 = inlined_call_operand.vmem [shape: bf16[1,64,32], index: 12, kind: input, shape index: {}]
  %s13 = inlined_call_operand.vmem [shape: f32[1,32], index: 13, kind: input, shape index: {}]
  %s14 = inlined_call_operand.vmem [shape: f32[1,32], index: 14, kind: input, shape index: {}]
  %s15 = inlined_call_operand.vmem [shape: f32[1,32], index: 15, kind: input, shape index: {}]
  %s16 = inlined_call_operand.vmem [shape: f32[1,32], index: 16, kind: input, shape index: {}]
  %s17 = inlined_call_operand.vmem [shape: f32[1,32], index: 17, kind: input, shape index: {}]
  %s18 = inlined_call_operand.hbm [shape: f32[2,16,32], index: 18, kind: output, shape index: {}]
  %s19 = sld [smem:[#allocation0]]
  $region123: #{tpu_custom_call.1} parent=0
    _
  %s21 = ssub.s32 1, %s19
  %s22 = scalar_select 0, %s21, %s19
  $region1: #{tpu_custom_call.1} parent=0
    #allocation5 [shape = 'u8[8192]{0}', space=vmem, size = 0x2000, scoped, tag = 'output window, operand 0']
    #allocation6 [shape = 's32[2]{0}', space=sflag, size = 0x8, scoped, tag = 'scoped memory for tpu_custom_call.1']
    %23 = vsyncpa [#allocation6], 0
    %s24 = scalar_lea.sflag [#allocation6], 1
    %25 = vsyncpa %s24, 0
    loop: start=0, step=1, limit=6
    $region2: #{tpu_custom_call.1} parent=1 // loop_pre_header
      _
    $region3: #{tpu_custom_call.1} parent=1 // loop_header
      %s27 = sphi 0, %s31
      %p28 = scmp.ge.s32.totalorder %s27, 6
      %s34 = sphi 0, %s46
      %s35 = sphi 0, %s42
      %s36 = sphi 0, %s34
      %s37 = sphi 0, %s35
      %s38 = sphi 0, %s36
      %s39 = sphi 0, %s37
      %s51 = sphi 0, %s53
      %s54 = sphi 0, %s51
      %s55 = sphi 0, %s54
      %s71 = sphi 0, %s55
      %s77 = sphi 0, %s79
      %s80 = sphi 0, %s77
      %s81 = sphi 0, %s80
      %s97 = sphi 0, %s81
      %s101 = sphi 0, %s101
      %s103 = sphi 0, %s101
      %s104 = sphi 0, %s103
      %s118 = sphi 0, %s104
      %s122 = sphi 0, %s122
      %s124 = sphi 0, %s122
      %s125 = sphi 0, %s124
      %s139 = sphi 0, %s125
      %s143 = sphi 0, %s143
      %s145 = sphi 0, %s143
      %s146 = sphi 0, %s145
      %s160 = sphi 0, %s146
      %s164 = sphi 0, %s164
      %s166 = sphi 0, %s164
      %s167 = sphi 0, %s166
      %s181 = sphi 0, %s167
      %s185 = sphi 0, %s185
      %s187 = sphi 0, %s185
      %s188 = sphi 0, %s187
      %s202 = sphi 0, %s188
      %s206 = sphi 0, %s206
      %s208 = sphi 0, %s206
      %s209 = sphi 0, %s208
      %s223 = sphi 0, %s209
      %s227 = sphi 0, %s227
      %s229 = sphi 0, %s227
      %s230 = sphi 0, %s229
      %s244 = sphi 0, %s230
      %s248 = sphi 0, %s248
      %s250 = sphi 0, %s248
      %s251 = sphi 0, %s250
      %s265 = sphi 0, %s251
      %s269 = sphi 0, %s269
      %s271 = sphi 0, %s269
      %s272 = sphi 0, %s271
      %s286 = sphi 0, %s272
      %s290 = sphi 0, %s290
      %s292 = sphi 0, %s290
      %s293 = sphi 0, %s292
      %s307 = sphi 0, %s293
      %s311 = sphi 0, %s311
      %s313 = sphi 0, %s311
      %s314 = sphi 0, %s313
      %s328 = sphi 0, %s314
      %s332 = sphi 0, %s332
      %s334 = sphi 0, %s332
      %s335 = sphi 0, %s334
      %s349 = sphi 0, %s335
      %s353 = sphi 0, %s353
      %s355 = sphi 0, %s353
      %s356 = sphi 0, %s355
      %s370 = sphi 0, %s356
      %s374 = sphi 0, %s374
      %s376 = sphi 0, %s374
      %s377 = sphi 0, %s376
      %s391 = sphi 0, %s377
      %s395 = sphi 0, %s395
      %s397 = sphi 0, %s395
      %s398 = sphi 0, %s397
      %s412 = sphi 0, %s398
      %s416 = sphi 0, %s416
      %s418 = sphi 0, %s416
      %s419 = sphi 0, %s418
      %s433 = sphi 0, %s419
      %s441 = sphi 0, %s443
      %s444 = sphi 0, %s441
      %s445 = sphi 0, %s444
      %s461 = sphi 0, %s445
    $region4: #{tpu_custom_call.1} parent=1 // loop_header_branch
      %30 = sbr.rel (%p28) target = $region8
    $region5: #{tpu_custom_call.1} parent=1 // loop_body
      %s32 = ssub.s32 %s27, 1
      %s33 = ssub.s32 %s27, 2
      %s40 = sadd.s32 1, %s35
      %p41 = scmp.ge.s32.totalorder %s40, 2
      %s42 = scalar_select %p41, 0, %s40
      %s43 = sadd.s32 1, %s34
      %s44 = scalar_select %p41, %s43, %s34
      %p45 = scmp.ge.s32.totalorder %s44, 2
      %s46 = scalar_select %p45, 0, %s44
      %s47 = ssub.s32 %s34, %s46
      %s48 = ssub.s32 %s35, %s42
      %s49 = sor.u32 %s47, %s48
      %p50 = scmp.eq.s32.totalorder %s49, 0
      %s52 = sadd.s32 %s51, 1
      %s53 = scalar_select %p50, %s51, %s52
      %p56 = pneg %p50
      %p57 = scmp.eq.s32.totalorder %s27, 3
      %p58 = por %p56, %p57
      %p59 = scmp.ne.s32.totalorder %s51, %s54
      %p60 = scmp.eq.s32.totalorder %s27, 0
      %p61 = por %p59, %p60
      %p62 = scmp.ne.s32.totalorder %s51, %s54
      %p63 = scmp.eq.s32.totalorder %s32, 3
      %p64 = por %p62, %p63
      %p65 = scmp.ne.s32.totalorder %s54, %s55
      %p66 = scmp.eq.s32.totalorder %s32, 0
      %p67 = por %p65, %p66
      %p68 = scmp.ne.s32.totalorder %s54, %s55
      %p69 = scmp.eq.s32.totalorder %s33, 3
      %p70 = por %p68, %p69
      %p72 = scmp.ne.s32.totalorder %s55, %s71
      %p73 = scmp.eq.s32.totalorder %s33, 0
      %p74 = por %p72, %p73
      %s75 = ssub.s32 %s34, %s46
      %p76 = scmp.eq.s32.totalorder %s75, 0
      %s78 = sadd.s32 %s77, 1
      %s79 = scalar_select %p76, %s77, %s78
      %p82 = pneg %p76
      %p83 = scmp.eq.s32.totalorder %s27, 3
      %p84 = por %p82, %p83
      %p85 = scmp.ne.s32.totalorder %s77, %s80
      %p86 = scmp.eq.s32.totalorder %s27, 0
      %p87 = por %p85, %p86
      %p88 = scmp.ne.s32.totalorder %s77, %s80
      %p89 = scmp.eq.s32.totalorder %s32, 3
      %p90 = por %p88, %p89
      %p91 = scmp.ne.s32.totalorder %s80, %s81
      %p92 = scmp.eq.s32.totalorder %s32, 0
      %p93 = por %p91, %p92
      %p94 = scmp.ne.s32.totalorder %s80, %s81
      %p95 = scmp.eq.s32.totalorder %s33, 3
      %p96 = por %p94, %p95
      %p98 = scmp.ne.s32.totalorder %s81, %s97
      %p99 = scmp.eq.s32.totalorder %s33, 0
      %p100 = por %p98, %p99
      %s102 = sadd.s32 %s101, 1
      %p105 = scmp.eq.s32.totalorder %s27, 3
      %p106 = scmp.ne.s32.totalorder %s101, %s103
      %p107 = scmp.eq.s32.totalorder %s27, 0
      %p108 = por %p106, %p107
      %p109 = scmp.ne.s32.totalorder %s101, %s103
      %p110 = scmp.eq.s32.totalorder %s32, 3
      %p111 = por %p109, %p110
      %p112 = scmp.ne.s32.totalorder %s103, %s104
      %p113 = scmp.eq.s32.totalorder %s32, 0
      %p114 = por %p112, %p113
      %p115 = scmp.ne.s32.totalorder %s103, %s104
      %p116 = scmp.eq.s32.totalorder %s33, 3
      %p117 = por %p115, %p116
      %p119 = scmp.ne.s32.totalorder %s104, %s118
      %p120 = scmp.eq.s32.totalorder %s33, 0
      %p121 = por %p119, %p120
      %s123 = sadd.s32 %s122, 1
      %p126 = scmp.eq.s32.totalorder %s27, 3
      %p127 = scmp.ne.s32.totalorder %s122, %s124
      %p128 = scmp.eq.s32.totalorder %s27, 0
      %p129 = por %p127, %p128
      %p130 = scmp.ne.s32.totalorder %s122, %s124
      %p131 = scmp.eq.s32.totalorder %s32, 3
      %p132 = por %p130, %p131
      %p133 = scmp.ne.s32.totalorder %s124, %s125
      %p134 = scmp.eq.s32.totalorder %s32, 0
      %p135 = por %p133, %p134
      %p136 = scmp.ne.s32.totalorder %s124, %s125
      %p137 = scmp.eq.s32.totalorder %s33, 3
      %p138 = por %p136, %p137
      %p140 = scmp.ne.s32.totalorder %s125, %s139
      %p141 = scmp.eq.s32.totalorder %s33, 0
      %p142 = por %p140, %p141
      %s144 = sadd.s32 %s143, 1
      %p147 = scmp.eq.s32.totalorder %s27, 3
      %p148 = scmp.ne.s32.totalorder %s143, %s145
      %p149 = scmp.eq.s32.totalorder %s27, 0
      %p150 = por %p148, %p149
      %p151 = scmp.ne.s32.totalorder %s143, %s145
      %p152 = scmp.eq.s32.totalorder %s32, 3
      %p153 = por %p151, %p152
      %p154 = scmp.ne.s32.totalorder %s145, %s146
      %p155 = scmp.eq.s32.totalorder %s32, 0
      %p156 = por %p154, %p155
      %p157 = scmp.ne.s32.totalorder %s145, %s146
      %p158 = scmp.eq.s32.totalorder %s33, 3
      %p159 = por %p157, %p158
      %p161 = scmp.ne.s32.totalorder %s146, %s160
      %p162 = scmp.eq.s32.totalorder %s33, 0
      %p163 = por %p161, %p162
      %s165 = sadd.s32 %s164, 1
      %p168 = scmp.eq.s32.totalorder %s27, 3
      %p169 = scmp.ne.s32.totalorder %s164, %s166
      %p170 = scmp.eq.s32.totalorder %s27, 0
      %p171 = por %p169, %p170
      %p172 = scmp.ne.s32.totalorder %s164, %s166
      %p173 = scmp.eq.s32.totalorder %s32, 3
      %p174 = por %p172, %p173
      %p175 = scmp.ne.s32.totalorder %s166, %s167
      %p176 = scmp.eq.s32.totalorder %s32, 0
      %p177 = por %p175, %p176
      %p178 = scmp.ne.s32.totalorder %s166, %s167
      %p179 = scmp.eq.s32.totalorder %s33, 3
      %p180 = por %p178, %p179
      %p182 = scmp.ne.s32.totalorder %s167, %s181
      %p183 = scmp.eq.s32.totalorder %s33, 0
      %p184 = por %p182, %p183
      %s186 = sadd.s32 %s185, 1
      %p189 = scmp.eq.s32.totalorder %s27, 3
      %p190 = scmp.ne.s32.totalorder %s185, %s187
      %p191 = scmp.eq.s32.totalorder %s27, 0
      %p192 = por %p190, %p191
      %p193 = scmp.ne.s32.totalorder %s185, %s187
      %p194 = scmp.eq.s32.totalorder %s32, 3
      %p195 = por %p193, %p194
      %p196 = scmp.ne.s32.totalorder %s187, %s188
      %p197 = scmp.eq.s32.totalorder %s32, 0
      %p198 = por %p196, %p197
      %p199 = scmp.ne.s32.totalorder %s187, %s188
      %p200 = scmp.eq.s32.totalorder %s33, 3
      %p201 = por %p199, %p200
      %p203 = scmp.ne.s32.totalorder %s188, %s202
      %p204 = scmp.eq.s32.totalorder %s33, 0
      %p205 = por %p203, %p204
      %s207 = sadd.s32 %s206, 1
      %p210 = scmp.eq.s32.totalorder %s27, 3
      %p211 = scmp.ne.s32.totalorder %s206, %s208
      %p212 = scmp.eq.s32.totalorder %s27, 0
      %p213 = por %p211, %p212
      %p214 = scmp.ne.s32.totalorder %s206, %s208
      %p215 = scmp.eq.s32.totalorder %s32, 3
      %p216 = por %p214, %p215
      %p217 = scmp.ne.s32.totalorder %s208, %s209
      %p218 = scmp.eq.s32.totalorder %s32, 0
      %p219 = por %p217, %p218
      %p220 = scmp.ne.s32.totalorder %s208, %s209
      %p221 = scmp.eq.s32.totalorder %s33, 3
      %p222 = por %p220, %p221
      %p224 = scmp.ne.s32.totalorder %s209, %s223
      %p225 = scmp.eq.s32.totalorder %s33, 0
      %p226 = por %p224, %p225
      %s228 = sadd.s32 %s227, 1
      %p231 = scmp.eq.s32.totalorder %s27, 3
      %p232 = scmp.ne.s32.totalorder %s227, %s229
      %p233 = scmp.eq.s32.totalorder %s27, 0
      %p234 = por %p232, %p233
      %p235 = scmp.ne.s32.totalorder %s227, %s229
      %p236 = scmp.eq.s32.totalorder %s32, 3
      %p237 = por %p235, %p236
      %p238 = scmp.ne.s32.totalorder %s229, %s230
      %p239 = scmp.eq.s32.totalorder %s32, 0
      %p240 = por %p238, %p239
      %p241 = scmp.ne.s32.totalorder %s229, %s230
      %p242 = scmp.eq.s32.totalorder %s33, 3
      %p243 = por %p241, %p242
      %p245 = scmp.ne.s32.totalorder %s230, %s244
      %p246 = scmp.eq.s32.totalorder %s33, 0
      %p247 = por %p245, %p246
      %s249 = sadd.s32 %s248, 1
      %p252 = scmp.eq.s32.totalorder %s27, 3
      %p253 = scmp.ne.s32.totalorder %s248, %s250
      %p254 = scmp.eq.s32.totalorder %s27, 0
      %p255 = por %p253, %p254
      %p256 = scmp.ne.s32.totalorder %s248, %s250
      %p257 = scmp.eq.s32.totalorder %s32, 3
      %p258 = por %p256, %p257
      %p259 = scmp.ne.s32.totalorder %s250, %s251
      %p260 = scmp.eq.s32.totalorder %s32, 0
      %p261 = por %p259, %p260
      %p262 = scmp.ne.s32.totalorder %s250, %s251
      %p263 = scmp.eq.s32.totalorder %s33, 3
      %p264 = por %p262, %p263
      %p266 = scmp.ne.s32.totalorder %s251, %s265
      %p267 = scmp.eq.s32.totalorder %s33, 0
      %p268 = por %p266, %p267
      %s270 = sadd.s32 %s269, 1
      %p273 = scmp.eq.s32.totalorder %s27, 3
      %p274 = scmp.ne.s32.totalorder %s269, %s271
      %p275 = scmp.eq.s32.totalorder %s27, 0
      %p276 = por %p274, %p275
      %p277 = scmp.ne.s32.totalorder %s269, %s271
      %p278 = scmp.eq.s32.totalorder %s32, 3
      %p279 = por %p277, %p278
      %p280 = scmp.ne.s32.totalorder %s271, %s272
      %p281 = scmp.eq.s32.totalorder %s32, 0
      %p282 = por %p280, %p281
      %p283 = scmp.ne.s32.totalorder %s271, %s272
      %p284 = scmp.eq.s32.totalorder %s33, 3
      %p285 = por %p283, %p284
      %p287 = scmp.ne.s32.totalorder %s272, %s286
      %p288 = scmp.eq.s32.totalorder %s33, 0
      %p289 = por %p287, %p288
      %s291 = sadd.s32 %s290, 1
      %p294 = scmp.eq.s32.totalorder %s27, 3
      %p295 = scmp.ne.s32.totalorder %s290, %s292
      %p296 = scmp.eq.s32.totalorder %s27, 0
      %p297 = por %p295, %p296
      %p298 = scmp.ne.s32.totalorder %s290, %s292
      %p299 = scmp.eq.s32.totalorder %s32, 3
      %p300 = por %p298, %p299
      %p301 = scmp.ne.s32.totalorder %s292, %s293
      %p302 = scmp.eq.s32.totalorder %s32, 0
      %p303 = por %p301, %p302
      %p304 = scmp.ne.s32.totalorder %s292, %s293
      %p305 = scmp.eq.s32.totalorder %s33, 3
      %p306 = por %p304, %p305
      %p308 = scmp.ne.s32.totalorder %s293, %s307
      %p309 = scmp.eq.s32.totalorder %s33, 0
      %p310 = por %p308, %p309
      %s312 = sadd.s32 %s311, 1
      %p315 = scmp.eq.s32.totalorder %s27, 3
      %p316 = scmp.ne.s32.totalorder %s311, %s313
      %p317 = scmp.eq.s32.totalorder %s27, 0
      %p318 = por %p316, %p317
      %p319 = scmp.ne.s32.totalorder %s311, %s313
      %p320 = scmp.eq.s32.totalorder %s32, 3
      %p321 = por %p319, %p320
      %p322 = scmp.ne.s32.totalorder %s313, %s314
      %p323 = scmp.eq.s32.totalorder %s32, 0
      %p324 = por %p322, %p323
      %p325 = scmp.ne.s32.totalorder %s313, %s314
      %p326 = scmp.eq.s32.totalorder %s33, 3
      %p327 = por %p325, %p326
      %p329 = scmp.ne.s32.totalorder %s314, %s328
      %p330 = scmp.eq.s32.totalorder %s33, 0
      %p331 = por %p329, %p330
      %s333 = sadd.s32 %s332, 1
      %p336 = scmp.eq.s32.totalorder %s27, 3
      %p337 = scmp.ne.s32.totalorder %s332, %s334
      %p338 = scmp.eq.s32.totalorder %s27, 0
      %p339 = por %p337, %p338
      %p340 = scmp.ne.s32.totalorder %s332, %s334
      %p341 = scmp.eq.s32.totalorder %s32, 3
      %p342 = por %p340, %p341
      %p343 = scmp.ne.s32.totalorder %s334, %s335
      %p344 = scmp.eq.s32.totalorder %s32, 0
      %p345 = por %p343, %p344
      %p346 = scmp.ne.s32.totalorder %s334, %s335
      %p347 = scmp.eq.s32.totalorder %s33, 3
      %p348 = por %p346, %p347
      %p350 = scmp.ne.s32.totalorder %s335, %s349
      %p351 = scmp.eq.s32.totalorder %s33, 0
      %p352 = por %p350, %p351
      %s354 = sadd.s32 %s353, 1
      %p357 = scmp.eq.s32.totalorder %s27, 3
      %p358 = scmp.ne.s32.totalorder %s353, %s355
      %p359 = scmp.eq.s32.totalorder %s27, 0
      %p360 = por %p358, %p359
      %p361 = scmp.ne.s32.totalorder %s353, %s355
      %p362 = scmp.eq.s32.totalorder %s32, 3
      %p363 = por %p361, %p362
      %p364 = scmp.ne.s32.totalorder %s355, %s356
      %p365 = scmp.eq.s32.totalorder %s32, 0
      %p366 = por %p364, %p365
      %p367 = scmp.ne.s32.totalorder %s355, %s356
      %p368 = scmp.eq.s32.totalorder %s33, 3
      %p369 = por %p367, %p368
      %p371 = scmp.ne.s32.totalorder %s356, %s370
      %p372 = scmp.eq.s32.totalorder %s33, 0
      %p373 = por %p371, %p372
      %s375 = sadd.s32 %s374, 1
      %p378 = scmp.eq.s32.totalorder %s27, 3
      %p379 = scmp.ne.s32.totalorder %s374, %s376
      %p380 = scmp.eq.s32.totalorder %s27, 0
      %p381 = por %p379, %p380
      %p382 = scmp.ne.s32.totalorder %s374, %s376
      %p383 = scmp.eq.s32.totalorder %s32, 3
      %p384 = por %p382, %p383
      %p385 = scmp.ne.s32.totalorder %s376, %s377
      %p386 = scmp.eq.s32.totalorder %s32, 0
      %p387 = por %p385, %p386
      %p388 = scmp.ne.s32.totalorder %s376, %s377
      %p389 = scmp.eq.s32.totalorder %s33, 3
      %p390 = por %p388, %p389
      %p392 = scmp.ne.s32.totalorder %s377, %s391
      %p393 = scmp.eq.s32.totalorder %s33, 0
      %p394 = por %p392, %p393
      %s396 = sadd.s32 %s395, 1
      %p399 = scmp.eq.s32.totalorder %s27, 3
      %p400 = scmp.ne.s32.totalorder %s395, %s397
      %p401 = scmp.eq.s32.totalorder %s27, 0
      %p402 = por %p400, %p401
      %p403 = scmp.ne.s32.totalorder %s395, %s397
      %p404 = scmp.eq.s32.totalorder %s32, 3
      %p405 = por %p403, %p404
      %p406 = scmp.ne.s32.totalorder %s397, %s398
      %p407 = scmp.eq.s32.totalorder %s32, 0
      %p408 = por %p406, %p407
      %p409 = scmp.ne.s32.totalorder %s397, %s398
      %p410 = scmp.eq.s32.totalorder %s33, 3
      %p411 = por %p409, %p410
      %p413 = scmp.ne.s32.totalorder %s398, %s412
      %p414 = scmp.eq.s32.totalorder %s33, 0
      %p415 = por %p413, %p414
      %s417 = sadd.s32 %s416, 1
      %p420 = scmp.eq.s32.totalorder %s27, 3
      %p421 = scmp.ne.s32.totalorder %s416, %s418
      %p422 = scmp.eq.s32.totalorder %s27, 0
      %p423 = por %p421, %p422
      %p424 = scmp.ne.s32.totalorder %s416, %s418
      %p425 = scmp.eq.s32.totalorder %s32, 3
      %p426 = por %p424, %p425
      %p427 = scmp.ne.s32.totalorder %s418, %s419
      %p428 = scmp.eq.s32.totalorder %s32, 0
      %p429 = por %p427, %p428
      %p430 = scmp.ne.s32.totalorder %s418, %s419
      %p431 = scmp.eq.s32.totalorder %s33, 3
      %p432 = por %p430, %p431
      %p434 = scmp.ne.s32.totalorder %s419, %s433
      %p435 = scmp.eq.s32.totalorder %s33, 0
      %p436 = por %p434, %p435
      %s437 = ssub.s32 %s34, %s46
      %s438 = ssub.s32 %s35, %s42
      %s439 = sor.u32 %s437, %s438
      %p440 = scmp.eq.s32.totalorder %s439, 0
      %s442 = sadd.s32 %s441, 1
      %s443 = scalar_select %p440, %s441, %s442
      %p446 = pneg %p440
      %p447 = scmp.eq.s32.totalorder %s27, 3
      %p448 = por %p446, %p447
      %p449 = scmp.ne.s32.totalorder %s441, %s444
      %p450 = scmp.eq.s32.totalorder %s27, 0
      %p451 = por %p449, %p450
      %p452 = scmp.ne.s32.totalorder %s441, %s444
      %p453 = scmp.eq.s32.totalorder %s32, 3
      %p454 = por %p452, %p453
      %p455 = scmp.ne.s32.totalorder %s444, %s445
      %p456 = scmp.eq.s32.totalorder %s32, 0
      %p457 = por %p455, %p456
      %p458 = scmp.ne.s32.totalorder %s444, %s445
      %p459 = scmp.eq.s32.totalorder %s33, 3
      %p460 = por %p458, %p459
      %p462 = scmp.ne.s32.totalorder %s445, %s461
      %p463 = scmp.eq.s32.totalorder %s33, 0
      %p464 = por %p462, %p463
      %p465 = scmp.le.s32.totalorder 1, %s27
      %p466 = scmp.lt.s32.totalorder %s27, 5
      %p467 = pnand %p465, %p466
      %p468 = pneg %p467
      // Predicated region
      $region9: #{tpu_custom_call.1} parent=5 // pred_check
        _
      $region10: #{tpu_custom_call.1} parent=5 // pred_check_branch
        %470 = sbr.rel (%p467) target = $region12
      $region11: #{tpu_custom_call.1} parent=5 // pred_region
        %s471 = ssub.s32 %s27, 1
        // Predicated region
        $region13: #{tpu_custom_call.1} parent=11 // pred_check
          %p472 = pneg %p93
        $region14: #{tpu_custom_call.1} parent=11 // pred_check_branch
          %474 = sbr.rel (%p472) target = $region16
        $region15: #{tpu_custom_call.1} parent=11 // pred_region
          %p475 = scmp.lt.s32.totalorder %s36, 1
          %s476 = scalar_select %p475, %s36, 1
          %s477 = smul.addr %s476, 2
          %s478 = smul.addr %s477, 4
          %s479 = scalar_lea.vmem %s1, %s478
        $region16: #{tpu_custom_call.1} parent=11 // pred_fallthru
          _
        // Predicated region
        $region17: #{tpu_custom_call.1} parent=11 // pred_check
          %p480 = pneg %p114
        $region18: #{tpu_custom_call.1} parent=11 // pred_check_branch
          %482 = sbr.rel (%p480) target = $region20
        $region19: #{tpu_custom_call.1} parent=11 // pred_region
          _
        $region20: #{tpu_custom_call.1} parent=11 // pred_fallthru
          _
        // Predicated region
        $region21: #{tpu_custom_call.1} parent=11 // pred_check
          %p483 = pneg %p135
        $region22: #{tpu_custom_call.1} parent=11 // pred_check_branch
          %485 = sbr.rel (%p483) target = $region24
        $region23: #{tpu_custom_call.1} parent=11 // pred_region
          _
        $region24: #{tpu_custom_call.1} parent=11 // pred_fallthru
          _
        // Predicated region
        $region25: #{tpu_custom_call.1} parent=11 // pred_check
          %p486 = pneg %p156
        $region26: #{tpu_custom_call.1} parent=11 // pred_check_branch
          %488 = sbr.rel (%p486) target = $region28
        $region27: #{tpu_custom_call.1} parent=11 // pred_region
          _
        $region28: #{tpu_custom_call.1} parent=11 // pred_fallthru
          _
        // Predicated region
        $region29: #{tpu_custom_call.1} parent=11 // pred_check
          %p489 = pneg %p177
        $region30: #{tpu_custom_call.1} parent=11 // pred_check_branch
          %491 = sbr.rel (%p489) target = $region32
        $region31: #{tpu_custom_call.1} parent=11 // pred_region
          _
        $region32: #{tpu_custom_call.1} parent=11 // pred_fallthru
          _
        // Predicated region
        $region33: #{tpu_custom_call.1} parent=11 // pred_check
          %p492 = pneg %p198
        $region34: #{tpu_custom_call.1} parent=11 // pred_check_branch
          %494 = sbr.rel (%p492) target = $region36
        $region35: #{tpu_custom_call.1} parent=11 // pred_region
          _
        $region36: #{tpu_custom_call.1} parent=11 // pred_fallthru
          _
        // Predicated region
        $region37: #{tpu_custom_call.1} parent=11 // pred_check
          %p495 = pneg %p219
        $region38: #{tpu_custom_call.1} parent=11 // pred_check_branch
          %497 = sbr.rel (%p495) target = $region40
        $region39: #{tpu_custom_call.1} parent=11 // pred_region
          _
        $region40: #{tpu_custom_call.1} parent=11 // pred_fallthru
          _
        // Predicated region
        $region41: #{tpu_custom_call.1} parent=11 // pred_check
          %p498 = pneg %p240
        $region42: #{tpu_custom_call.1} parent=11 // pred_check_branch
          %500 = sbr.rel (%p498) target = $region44
        $region43: #{tpu_custom_call.1} parent=11 // pred_region
          _
        $region44: #{tpu_custom_call.1} parent=11 // pred_fallthru
          _
        // Predicated region
        $region45: #{tpu_custom_call.1} parent=11 // pred_check
          %p501 = pneg %p261
        $region46: #{tpu_custom_call.1} parent=11 // pred_check_branch
          %503 = sbr.rel (%p501) target = $region48
        $region47: #{tpu_custom_call.1} parent=11 // pred_region
          _
        $region48: #{tpu_custom_call.1} parent=11 // pred_fallthru
          _
        // Predicated region
        $region49: #{tpu_custom_call.1} parent=11 // pred_check
          %p504 = pneg %p282
        $region50: #{tpu_custom_call.1} parent=11 // pred_check_branch
          %506 = sbr.rel (%p504) target = $region52
        $region51: #{tpu_custom_call.1} parent=11 // pred_region
          _
        $region52: #{tpu_custom_call.1} parent=11 // pred_fallthru
          _
        // Predicated region
        $region53: #{tpu_custom_call.1} parent=11 // pred_check
          %p507 = pneg %p303
        $region54: #{tpu_custom_call.1} parent=11 // pred_check_branch
          %509 = sbr.rel (%p507) target = $region56
        $region55: #{tpu_custom_call.1} parent=11 // pred_region
          _
        $region56: #{tpu_custom_call.1} parent=11 // pred_fallthru
          _
        // Predicated region
        $region57: #{tpu_custom_call.1} parent=11 // pred_check
          %p510 = pneg %p324
        $region58: #{tpu_custom_call.1} parent=11 // pred_check_branch
          %512 = sbr.rel (%p510) target = $region60
        $region59: #{tpu_custom_call.1} parent=11 // pred_region
          _
        $region60: #{tpu_custom_call.1} parent=11 // pred_fallthru
          _
        // Predicated region
        $region61: #{tpu_custom_call.1} parent=11 // pred_check
          %p513 = pneg %p345
        $region62: #{tpu_custom_call.1} parent=11 // pred_check_branch
          %515 = sbr.rel (%p513) target = $region64
        $region63: #{tpu_custom_call.1} parent=11 // pred_region
          _
        $region64: #{tpu_custom_call.1} parent=11 // pred_fallthru
          _
        // Predicated region
        $region65: #{tpu_custom_call.1} parent=11 // pred_check
          %p516 = pneg %p366
        $region66: #{tpu_custom_call.1} parent=11 // pred_check_branch
          %518 = sbr.rel (%p516) target = $region68
        $region67: #{tpu_custom_call.1} parent=11 // pred_region
          _
        $region68: #{tpu_custom_call.1} parent=11 // pred_fallthru
          _
        // Predicated region
        $region69: #{tpu_custom_call.1} parent=11 // pred_check
          %p519 = pneg %p387
        $region70: #{tpu_custom_call.1} parent=11 // pred_check_branch
          %521 = sbr.rel (%p519) target = $region72
        $region71: #{tpu_custom_call.1} parent=11 // pred_region
          _
        $region72: #{tpu_custom_call.1} parent=11 // pred_fallthru
          _
        // Predicated region
        $region73: #{tpu_custom_call.1} parent=11 // pred_check
          %p522 = pneg %p408
        $region74: #{tpu_custom_call.1} parent=11 // pred_check_branch
          %524 = sbr.rel (%p522) target = $region76
        $region75: #{tpu_custom_call.1} parent=11 // pred_region
          _
        $region76: #{tpu_custom_call.1} parent=11 // pred_fallthru
          _
        // Predicated region
        $region77: #{tpu_custom_call.1} parent=11 // pred_check
          %p525 = pneg %p429
        $region78: #{tpu_custom_call.1} parent=11 // pred_check_branch
          %527 = sbr.rel (%p525) target = $region80
        $region79: #{tpu_custom_call.1} parent=11 // pred_region
          _
        $region80: #{tpu_custom_call.1} parent=11 // pred_fallthru
          _
      $region12: #{tpu_custom_call.1} parent=5 // pred_fallthru
        _
      %p528 = scmp.lt.s32.totalorder %s27, 4
      // Predicated region
      $region81: #{tpu_custom_call.1} parent=5 // pred_check
        %p529 = pneg %p528
      $region82: #{tpu_custom_call.1} parent=5 // pred_check_branch
        %531 = sbr.rel (%p529) target = $region84
      $region83: #{tpu_custom_call.1} parent=5 // pred_region
        // Predicated region
        $region85: #{tpu_custom_call.1} parent=83 // pred_check
          %p532 = pneg %p61
        $region86: #{tpu_custom_call.1} parent=83 // pred_check_branch
          %534 = sbr.rel (%p532) target = $region88
        $region87: #{tpu_custom_call.1} parent=83 // pred_region
          %p535 = scmp.lt.s32.totalorder %s34, 1
          %s536 = scalar_select %p535, %s34, 1
          %p537 = scmp.lt.s32.totalorder %s35, 1
          %s538 = scalar_select %p537, %s35, 1
          %s539 = smul.addr %s536, 2
          %s540 = sadd.s32 %s538, %s539
          %s541 = smul.addr %s540, 8
          %s542 = scalar_lea.vmem %s0, %s541
        $region88: #{tpu_custom_call.1} parent=83 // pred_fallthru
          _
      $region84: #{tpu_custom_call.1} parent=5 // pred_fallthru
        _
      %p543 = scmp.le.s32.totalorder 1, %s27
      %p544 = scmp.lt.s32.totalorder %s27, 5
      %p545 = pnand %p543, %p544
      %p546 = pneg %p545
      // Predicated region
      $region89: #{tpu_custom_call.1} parent=5 // pred_check
        _
      $region90: #{tpu_custom_call.1} parent=5 // pred_check_branch
        %548 = sbr.rel (%p545) target = $region92
      $region91: #{tpu_custom_call.1} parent=5 // pred_region
        %s549 = ssub.s32 %s27, 1
        %p550 = scmp.lt.s32.totalorder %s36, 1
        %s551 = scalar_select %p550, %s36, 1
        %p552 = scmp.lt.s32.totalorder %s37, 1
        %s553 = scalar_select %p552, %s37, 1
        %s554 = smul.addr %s551, 2
        %s555 = sadd.s32 %s553, %s554
        %s556 = smul.addr %s555, 8
        %s557 = scalar_lea.vmem %s0, %s556
        %p558 = pneg %p67
        %p559 = pneg %p64
        %p560 = scmp.lt.s32.totalorder %s36, 1
        %s561 = scalar_select %p560, %s36, 1
        %s562 = smul.addr %s561, 2
        %s563 = smul.addr %s562, 4
        %s564 = scalar_lea.vmem %s1, %s563
        %p565 = pneg %p93
        %p566 = pneg %p90
        %p567 = pneg %p114
        %p568 = pneg %p111
        %p569 = pneg %p135
        %p570 = pneg %p132
        %p571 = pneg %p156
        %p572 = pneg %p153
        %p573 = pneg %p177
        %p574 = pneg %p174
        %p575 = pneg %p198
        %p576 = pneg %p195
        %p577 = pneg %p219
        %p578 = pneg %p216
        %p579 = pneg %p240
        %p580 = pneg %p237
        %p581 = pneg %p261
        %p582 = pneg %p258
        %p583 = pneg %p282
        %p584 = pneg %p279
        %p585 = pneg %p303
        %p586 = pneg %p300
        %p587 = pneg %p324
        %p588 = pneg %p321
        %p589 = pneg %p345
        %p590 = pneg %p342
        %p591 = pneg %p366
        %p592 = pneg %p363
        %p593 = pneg %p387
        %p594 = pneg %p384
        %p595 = pneg %p408
        %p596 = pneg %p405
        %p597 = pneg %p429
        %p598 = pneg %p426
        %p599 = pneg %p457
        %p600 = pneg %p454
        %s601 = sand.u32 %s444, 1
        %s602 = scalar_lea.sflag [#allocation6], %s601
        %s603 = sand.u32 %s444, 1
        %s604 = smul.addr %s603, 8
        %s605 = scalar_lea.vmem [#allocation5], %s604
        %p606 = scmp.lt.s32.totalorder %s36, 1
        %s607 = scalar_select %p606, %s36, 1
        %p608 = scmp.lt.s32.totalorder %s37, 1
        %s609 = scalar_select %p608, %s37, 1
        %s610 = smul.addr %s607, 2
        %s611 = sadd.s32 %s609, %s610
        %s612 = smul.addr %s611, 8
        %s613 = scalar_lea.vmem %s0, %s612
        %p614 = scmp.lt.s32.totalorder %s36, 1
        %s615 = scalar_select %p614, %s36, 1
        %s616 = smul.addr %s615, 2
        %s617 = smul.addr %s616, 4
        %s618 = scalar_lea.vmem %s1, %s617
        %p620 = scmp.eq.s32.totalorder %s37, 0
        // Predicated region
        $region93: #{tpu_custom_call.1} parent=91 // pred_check
          %p621 = pneg %p620
        $region94: #{tpu_custom_call.1} parent=91 // pred_check_branch
          %623 = sbr.rel (%p621) target = $region96
        $region95: #{tpu_custom_call.1} parent=91 // pred_region
          %v624 = vld [vmem:[%s618] sm:$0xf]
          %v625 = vld [vmem:[%s618 + $0x4] sm:$0xf]
          loop: start=0, step=1, limit=4
          $region97: #{tpu_custom_call.1} parent=95 // loop_pre_header
            _
          $region98: #{tpu_custom_call.1} parent=95 // loop_header
            %s627 = sphi 0, %s631
            %p628 = scmp.ge.s32.totalorder %s627, 4
          $region99: #{tpu_custom_call.1} parent=95 // loop_header_branch
            %630 = sbr.rel (%p628) target = $region103
          $region100: #{tpu_custom_call.1} parent=95 // loop_body
            %s632 = smul.u32 %s627, 4
            %s633 = smul.addr %s632, 4
            %s634 = scalar_lea.vmem %s4, %s633
            %v635 = vld [vmem:[%s634] sm:$0xf]
            %v636 = vld [vmem:[%s634 + $0x4] sm:$0xf]
            %v637 = vld [vmem:[%s634 + $0x8] sm:$0xf]
            %v638 = vld [vmem:[%s634 + $0xc] sm:$0xf]
            %s639 = scalar_lea.vmem %s5, %s627
            %v640 = vld [vmem:[%s639] sm:$0x1]
            %v642 = vlaneseq
            %v643 = vshrl.u32 %v642, 7
            %v644 = vsub.s32 0, %v643
            %v645 = vrot.slane %v640, %v644
            %v649 = vunpack.c.l.b16 %v624
            %v650 = vunpack.c.l.b16 %v625
            %v651 = vpack.c.b16 %v650, %v649
            %v656 = vunpack.c.l.b16 %v635
            %v657 = vunpack.c.l.b16 %v636
            %v658 = vunpack.c.l.b16 %v637
            %v659 = vunpack.c.l.b16 %v638
            %v660 = vpack.c.b16 %v657, %v656
            %v661 = vpack.c.b16 %v659, %v658
            %vm664 = vcmask 261120
            %v666 = vsel %vm664, %v651, 0
            %668 = vmatprep.subr.bf16.mxu0 0
            %669 = vmatpush1.bf16.msra.mxu0 %v660
            %670 = vmatprep.subr.bf16.mxu0 0
            %671 = vmatpush1.bf16.msra.mxu0 %v661
            %672 = vmatprep.subr.bf16.mxu0 0
            %673 = vmatpush1.bf16.msra.mxu0 0
            %674 = vmatprep.subr.bf16.mxu0 0
            %675 = vmatpush1.bf16.msra.mxu0 0
            %676 = vmatprep.subr.bf16.mxu0 0
            %677 = vmatpush1.bf16.msra.mxu0 0
            %678 = vmatprep.subr.bf16.mxu0 0
            %679 = vmatpush1.bf16.msra.mxu0 0
            %680 = vmatprep.subr.bf16.mxu0 0
            %681 = vmatpush1.bf16.msra.mxu0 0
            %682 = vmatprep.subr.bf16.mxu0 0
            %683 = vmatpush1.bf16.msra.mxu0 0
            %684 = vmatprep.subr.bf16.mxu0 0
            %685 = vmatpush1.bf16.msra.mxu0 0
            %686 = vmatprep.subr.bf16.mxu0 0
            %687 = vmatpush1.bf16.msra.mxu0 0
            %688 = vmatprep.subr.bf16.mxu0 0
            %689 = vmatpush1.bf16.msra.mxu0 0
            %690 = vmatprep.subr.bf16.mxu0 0
            %691 = vmatpush1.bf16.msra.mxu0 0
            %692 = vmatprep.subr.bf16.mxu0 0
            %693 = vmatpush1.bf16.msra.mxu0 0
            %694 = vmatprep.subr.bf16.mxu0 0
            %695 = vmatpush1.bf16.msra.mxu0 0
            %696 = vmatprep.subr.bf16.mxu0 0
            %697 = vmatpush1.bf16.msra.mxu0 0
            %698 = vmatprep.subr.bf16.mxu0 0
            %699 = vmatpush1.bf16.msra.mxu0 0
            %700 = vmatprep.mubr.bf16.mxu0 0
            %701 = vmatmul.mubr.bf16.gmra.mrb[0].mxu0 %v666
            %v702 = vpop.f32.mrb[0].mxu0
            %v703 = vadd.f32 %v645, %v702
            %v704 = vpop.f32.mrb[0].mxu0
            %v705 = vpop.f32.mrb[0].mxu0
            %v706 = vadd.f32 %v645, %v705
            %v707 = vpop.f32.mrb[0].mxu0
            %708 = vdwg.mxu0
            %s709 = smul.addr %s632, 4
            %s710 = scalar_lea.vmem %s6, %s709
            %v711 = vld [vmem:[%s710] sm:$0xf]
            %v712 = vld [vmem:[%s710 + $0x4] sm:$0xf]
            %v713 = vld [vmem:[%s710 + $0x8] sm:$0xf]
            %v714 = vld [vmem:[%s710 + $0xc] sm:$0xf]
            %s715 = scalar_lea.vmem %s7, %s627
            %v716 = vld [vmem:[%s715] sm:$0x1]
            %v718 = vlaneseq
            %v719 = vshrl.u32 %v718, 7
            %v720 = vsub.s32 0, %v719
            %v721 = vrot.slane %v716, %v720
            %v727 = vunpack.c.l.b16 %v711
            %v728 = vunpack.c.l.b16 %v712
            %v729 = vunpack.c.l.b16 %v713
            %v730 = vunpack.c.l.b16 %v714
            %v731 = vpack.c.b16 %v728, %v727
            %v732 = vpack.c.b16 %v730, %v729
            %735 = vmatprep.subr.bf16.mxu0 0
            %736 = vmatpush1.bf16.msra.mxu0 %v731
            %737 = vmatprep.subr.bf16.mxu0 0
            %738 = vmatpush1.bf16.msra.mxu0 %v732
            %739 = vmatprep.subr.bf16.mxu0 0
            %740 = vmatpush1.bf16.msra.mxu0 0
            %741 = vmatprep.subr.bf16.mxu0 0
            %742 = vmatpush1.bf16.msra.mxu0 0
            %743 = vmatprep.subr.bf16.mxu0 0
            %744 = vmatpush1.bf16.msra.mxu0 0
            %745 = vmatprep.subr.bf16.mxu0 0
            %746 = vmatpush1.bf16.msra.mxu0 0
            %747 = vmatprep.subr.bf16.mxu0 0
            %748 = vmatpush1.bf16.msra.mxu0 0
            %749 = vmatprep.subr.bf16.mxu0 0
            %750 = vmatpush1.bf16.msra.mxu0 0
            %751 = vmatprep.subr.bf16.mxu0 0
            %752 = vmatpush1.bf16.msra.mxu0 0
            %753 = vmatprep.subr.bf16.mxu0 0
            %754 = vmatpush1.bf16.msra.mxu0 0
            %755 = vmatprep.subr.bf16.mxu0 0
            %756 = vmatpush1.bf16.msra.mxu0 0
            %757 = vmatprep.subr.bf16.mxu0 0
            %758 = vmatpush1.bf16.msra.mxu0 0
            %759 = vmatprep.subr.bf16.mxu0 0
            %760 = vmatpush1.bf16.msra.mxu0 0
            %761 = vmatprep.subr.bf16.mxu0 0
            %762 = vmatpush1.bf16.msra.mxu0 0
            %763 = vmatprep.subr.bf16.mxu0 0
            %764 = vmatpush1.bf16.msra.mxu0 0
            %765 = vmatprep.subr.bf16.mxu0 0
            %766 = vmatpush1.bf16.msra.mxu0 0
            %767 = vmatprep.mubr.bf16.mxu0 0
            %768 = vmatmul.mubr.bf16.gmra.mrb[0].mxu0 %v666
            %v769 = vpop.f32.mrb[0].mxu0
            %v770 = vadd.f32 %v721, %v769
            %v771 = vpop.f32.mrb[0].mxu0
            %v772 = vpop.f32.mrb[0].mxu0
            %v773 = vadd.f32 %v721, %v772
            %v774 = vpop.f32.mrb[0].mxu0
            %775 = vdwg.mxu0
            %776 = vxpose.xlu0.b32.start [1/16] %v703, 128
            %777 = vxpose.xlu0.b32.cont [2/16] %v706, 128
            %778 = vxpose.xlu0.b32.cont [3/16] 0.0, 128
            %779 = vxpose.xlu0.b32.cont [4/16] 0.0, 128
            %780 = vxpose.xlu0.b32.cont [5/16] 0.0, 128
            %781 = vxpose.xlu0.b32.cont [6/16] 0.0, 128
            %782 = vxpose.xlu0.b32.cont [7/16] 0.0, 128
            %783 = vxpose.xlu0.b32.cont [8/16] 0.0, 128
            %784 = vxpose.xlu0.b32.cont [9/16] 0.0, 128
            %785 = vxpose.xlu0.b32.cont [10/16] 0.0, 128
            %786 = vxpose.xlu0.b32.cont [11/16] 0.0, 128
            %787 = vxpose.xlu0.b32.cont [12/16] 0.0, 128
            %788 = vxpose.xlu0.b32.cont [13/16] 0.0, 128
            %789 = vxpose.xlu0.b32.cont [14/16] 0.0, 128
            %790 = vxpose.xlu0.b32.cont [15/16] 0.0, 128
            %791 = vxpose.xlu0.b32.end [16/16] 0.0, 128
            %v792 = vpop.trf.xlu0
            %v793 = vpop.trf.xlu0
            %v794 = vpop.trf.xlu0
            %v795 = vpop.trf.xlu0
            %v796 = vpop.trf.xlu0
            %v797 = vpop.trf.xlu0
            %v798 = vpop.trf.xlu0
            %v799 = vpop.trf.xlu0
            %v800 = vpop.trf.xlu0
            %v801 = vpop.trf.xlu0
            %v802 = vpop.trf.xlu0
            %v803 = vpop.trf.xlu0
            %v804 = vpop.trf.xlu0
            %v805 = vpop.trf.xlu0
            %v806 = vpop.trf.xlu0
            %v807 = vpop.trf.xlu0
            %v808 = vpack.c.bf16 %v792, %v792
            %s809 = smul.addr %s627, 4
            %s810 = scalar_lea.vmem [#allocation2], %s809
            %vm811 = vcmask 125952
            %812 = vst.msk [vmem:[%s810] sm:$0xf] %vm811, %v808
            %v813 = vpack.c.bf16 %v773, %v770
            %s814 = smul.addr %s627, 8
            %s815 = scalar_lea.vmem [#allocation3], %s814
            %vm816 = vcmask 64512
            %817 = vst.msk [vmem:[%s815] sm:$0xff] %vm816, %v813
          $region101: #{tpu_custom_call.1} parent=95 // loop_footer
            %s631 = sadd.s32 1, %s627
          $region102: #{tpu_custom_call.1} parent=95 // loop_footer_branch
            %626 = sbr.rel target = $region98
          $region103: #{tpu_custom_call.1} parent=95 // loop_exit
            _
        $region96: #{tpu_custom_call.1} parent=91 // pred_fallthru
          _
        %v818 = vld [vmem:[%s613] sm:$0xff]
        %v819 = vpack.c.bf16 %v818, %v818
        %vm820 = vcmask 261120
        %821 = vst.msk [vmem:[#allocation4] sm:$0xff] %vm820, 0.0
        loop: start=0, step=1, limit=4
        $region104: #{tpu_custom_call.1} parent=91 // loop_pre_header
          _
        $region105: #{tpu_custom_call.1} parent=91 // loop_header
          %s823 = sphi 0, %s827
          %p824 = scmp.ge.s32.totalorder %s823, 4
        $region106: #{tpu_custom_call.1} parent=91 // loop_header_branch
          %826 = sbr.rel (%p824) target = $region110
        $region107: #{tpu_custom_call.1} parent=91 // loop_body
          %s828 = smul.u32 %s823, 4
          %s829 = smul.addr %s828, 4
          %s830 = scalar_lea.vmem %s2, %s829
          %v831 = vld [vmem:[%s830] sm:$0xf]
          %v832 = vld [vmem:[%s830 + $0x4] sm:$0xf]
          %v833 = vld [vmem:[%s830 + $0x8] sm:$0xf]
          %v834 = vld [vmem:[%s830 + $0xc] sm:$0xf]
          %s835 = scalar_lea.vmem %s3, %s823
          %v836 = vld [vmem:[%s835] sm:$0x1]
          %v838 = vlaneseq
          %v839 = vshrl.u32 %v838, 7
          %v840 = vsub.s32 0, %v839
          %v841 = vrot.slane %v836, %v840
          %v847 = vunpack.c.l.b16 %v831
          %v848 = vunpack.c.l.b16 %v832
          %v849 = vunpack.c.l.b16 %v833
          %v850 = vunpack.c.l.b16 %v834
          %v851 = vpack.c.b16 %v848, %v847
          %v852 = vpack.c.b16 %v850, %v849
          %v856 = vsel %vm820, %v819, 0
          %858 = vmatprep.subr.bf16.mxu0 0
          %859 = vmatpush1.bf16.msra.mxu0 %v851
          %860 = vmatprep.subr.bf16.mxu0 0
          %861 = vmatpush1.bf16.msra.mxu0 %v852
          %862 = vmatprep.subr.bf16.mxu0 0
          %863 = vmatpush1.bf16.msra.mxu0 0
          %864 = vmatprep.subr.bf16.mxu0 0
          %865 = vmatpush1.bf16.msra.mxu0 0
          %866 = vmatprep.subr.bf16.mxu0 0
          %867 = vmatpush1.bf16.msra.mxu0 0
          %868 = vmatprep.subr.bf16.mxu0 0
          %869 = vmatpush1.bf16.msra.mxu0 0
          %870 = vmatprep.subr.bf16.mxu0 0
          %871 = vmatpush1.bf16.msra.mxu0 0
          %872 = vmatprep.subr.bf16.mxu0 0
          %873 = vmatpush1.bf16.msra.mxu0 0
          %874 = vmatprep.subr.bf16.mxu0 0
          %875 = vmatpush1.bf16.msra.mxu0 0
          %876 = vmatprep.subr.bf16.mxu0 0
          %877 = vmatpush1.bf16.msra.mxu0 0
          %878 = vmatprep.subr.bf16.mxu0 0
          %879 = vmatpush1.bf16.msra.mxu0 0
          %880 = vmatprep.subr.bf16.mxu0 0
          %881 = vmatpush1.bf16.msra.mxu0 0
          %882 = vmatprep.subr.bf16.mxu0 0
          %883 = vmatpush1.bf16.msra.mxu0 0
          %884 = vmatprep.subr.bf16.mxu0 0
          %885 = vmatpush1.bf16.msra.mxu0 0
          %886 = vmatprep.subr.bf16.mxu0 0
          %887 = vmatpush1.bf16.msra.mxu0 0
          %888 = vmatprep.subr.bf16.mxu0 0
          %889 = vmatpush1.bf16.msra.mxu0 0
          %890 = vmatprep.mubr.bf16.mxu0 0
          %891 = vmatmul.mubr.bf16.gmra.mrb[0].mxu0 %v856
          %v892 = vpop.f32.mrb[0].mxu0
          %v893 = vadd.f32 %v841, %v892
          %v894 = vpop.f32.mrb[0].mxu0
          %v895 = vpop.f32.mrb[0].mxu0
          %v896 = vpop.f32.mrb[0].mxu0
          %897 = vdwg.mxu0
          %v898 = vmul.f32 %v893, 0.35355338
          %v899 = vpack.c.bf16 %v898, %v898
          %s900 = smul.addr %s823, 4
          %s901 = scalar_lea.vmem [#allocation2], %s900
          %v902 = vld [vmem:[%s901] sm:$0xf]
          %vm903 = vcmask 64512
          %v905 = vsel %vm903, %v899, 0
          %vm907 = vcmask 1043456
          %v909 = vsel %vm907, %v902, 0
          %911 = vmatprep.subr.bf16.mxu0 0
          %912 = vmatpush1.bf16.msra.mxu0 %v909
          %913 = vmatprep.subr.bf16.mxu0 0
          %914 = vmatpush1.bf16.msra.mxu0 0
          %915 = vmatprep.subr.bf16.mxu0 0
          %916 = vmatpush1.bf16.msra.mxu0 0
          %917 = vmatprep.subr.bf16.mxu0 0
          %918 = vmatpush1.bf16.msra.mxu0 0
          %919 = vmatprep.subr.bf16.mxu0 0
          %920 = vmatpush1.bf16.msra.mxu0 0
          %921 = vmatprep.subr.bf16.mxu0 0
          %922 = vmatpush1.bf16.msra.mxu0 0
          %923 = vmatprep.subr.bf16.mxu0 0
          %924 = vmatpush1.bf16.msra.mxu0 0
          %925 = vmatprep.subr.bf16.mxu0 0
          %926 = vmatpush1.bf16.msra.mxu0 0
          %927 = vmatprep.subr.bf16.mxu0 0
          %928 = vmatpush1.bf16.msra.mxu0 0
          %929 = vmatprep.subr.bf16.mxu0 0
          %930 = vmatpush1.bf16.msra.mxu0 0
          %931 = vmatprep.subr.bf16.mxu0 0
          %932 = vmatpush1.bf16.msra.mxu0 0
          %933 = vmatprep.subr.bf16.mxu0 0
          %934 = vmatpush1.bf16.msra.mxu0 0
          %935 = vmatprep.subr.bf16.mxu0 0
          %936 = vmatpush1.bf16.msra.mxu0 0
          %937 = vmatprep.subr.bf16.mxu0 0
          %938 = vmatpush1.bf16.msra.mxu0 0
          %939 = vmatprep.subr.bf16.mxu0 0
          %940 = vmatpush1.bf16.msra.mxu0 0
          %941 = vmatprep.subr.bf16.mxu0 0
          %942 = vmatpush1.bf16.msra.mxu0 0
          %943 = vmatprep.mubr.bf16.mxu0 0
          %944 = vmatmul.mubr.bf16.gmra.mrb[0].mxu0 %v905
          %v945 = vpop.f32.mrb[0].mxu0
          %v946 = vadd.f32 0.0, %v945
          %v947 = vpop.f32.mrb[0].mxu0
          %v948 = vpop.f32.mrb[0].mxu0
          %v949 = vpop.f32.mrb[0].mxu0
          %950 = vdwg.mxu0
          %vm951 = vcmask 130048
          %v952 = vsel %vm951, %v946, -inf
          %953 = vmax.xlane.f32.xlu0 %v952
          %v954 = vpop.xlane.xlu0 %953
          %v955 = vsub.f32 %v946, %v954
          %v956 = vmul.f32 %v955, 1.442695
          %v957 = vpow.pop %v956
          %v958 = vsel %vm951, %v957, 0.0
          %959 = vadd.xlane.f32.xlu0 %v958
          %v960 = vpop.xlane.xlu0 %959
          %v961 = vrcp.pop %v960
          %v962 = vmul.f32 %v957, %v961
          %v963 = vpack.c.bf16 %v962, %v962
          %s964 = smul.addr %s823, 8
          %s965 = scalar_lea.vmem [#allocation3], %s964
          %v966 = vld [vmem:[%s965] sm:$0xff]
          %v968 = vsel %vm951, %v963, 0
          %970 = vmatprep.subr.bf16.mxu0 0
          %971 = vmatpush1.bf16.msra.mxu0 %v966
          %972 = vmatprep.subr.bf16.mxu0 0
          %973 = vmatpush1.bf16.msra.mxu0 0
          %974 = vmatprep.subr.bf16.mxu0 0
          %975 = vmatpush1.bf16.msra.mxu0 0
          %976 = vmatprep.subr.bf16.mxu0 0
          %977 = vmatpush1.bf16.msra.mxu0 0
          %978 = vmatprep.subr.bf16.mxu0 0
          %979 = vmatpush1.bf16.msra.mxu0 0
          %980 = vmatprep.subr.bf16.mxu0 0
          %981 = vmatpush1.bf16.msra.mxu0 0
          %982 = vmatprep.subr.bf16.mxu0 0
          %983 = vmatpush1.bf16.msra.mxu0 0
          %984 = vmatprep.subr.bf16.mxu0 0
          %985 = vmatpush1.bf16.msra.mxu0 0
          %986 = vmatprep.subr.bf16.mxu0 0
          %987 = vmatpush1.bf16.msra.mxu0 0
          %988 = vmatprep.subr.bf16.mxu0 0
          %989 = vmatpush1.bf16.msra.mxu0 0
          %990 = vmatprep.subr.bf16.mxu0 0
          %991 = vmatpush1.bf16.msra.mxu0 0
          %992 = vmatprep.subr.bf16.mxu0 0
          %993 = vmatpush1.bf16.msra.mxu0 0
          %994 = vmatprep.subr.bf16.mxu0 0
          %995 = vmatpush1.bf16.msra.mxu0 0
          %996 = vmatprep.subr.bf16.mxu0 0
          %997 = vmatpush1.bf16.msra.mxu0 0
          %998 = vmatprep.subr.bf16.mxu0 0
          %999 = vmatpush1.bf16.msra.mxu0 0
          %1000 = vmatprep.subr.bf16.mxu0 0
          %1001 = vmatpush1.bf16.msra.mxu0 0
          %1002 = vmatprep.mubr.bf16.mxu0 0
          %1003 = vmatmul.mubr.bf16.gmra.mrb[0].mxu0 %v968
          %v1004 = vpop.f32.mrb[0].mxu0
          %v1005 = vadd.f32 0.0, %v1004
          %v1006 = vpop.f32.mrb[0].mxu0
          %v1007 = vpop.f32.mrb[0].mxu0
          %v1008 = vpop.f32.mrb[0].mxu0
          %1009 = vdwg.mxu0
          %v1010 = vld [vmem:[#allocation4] sm:$0xff]
          %v1011 = vpack.c.bf16 %v1005, %v1005
          %s1012 = smul.addr %s823, 4
          %s1013 = scalar_lea.vmem %s8, %s1012
          %v1014 = vld [vmem:[%s1013] sm:$0xf]
          %v1016 = vsel %vm903, %v1011, 0
          %v1019 = vsel %vm907, %v1014, 0
          %1021 = vmatprep.subr.bf16.mxu0 0
          %1022 = vmatpush1.bf16.msra.mxu0 %v1019
          %1023 = vmatprep.subr.bf16.mxu0 0
          %1024 = vmatpush1.bf16.msra.mxu0 0
          %1025 = vmatprep.subr.bf16.mxu0 0
          %1026 = vmatpush1.bf16.msra.mxu0 0
          %1027 = vmatprep.subr.bf16.mxu0 0
          %1028 = vmatpush1.bf16.msra.mxu0 0
          %1029 = vmatprep.subr.bf16.mxu0 0
          %1030 = vmatpush1.bf16.msra.mxu0 0
          %1031 = vmatprep.subr.bf16.mxu0 0
          %1032 = vmatpush1.bf16.msra.mxu0 0
          %1033 = vmatprep.subr.bf16.mxu0 0
          %1034 = vmatpush1.bf16.msra.mxu0 0
          %1035 = vmatprep.subr.bf16.mxu0 0
          %1036 = vmatpush1.bf16.msra.mxu0 0
          %1037 = vmatprep.subr.bf16.mxu0 0
          %1038 = vmatpush1.bf16.msra.mxu0 0
          %1039 = vmatprep.subr.bf16.mxu0 0
          %1040 = vmatpush1.bf16.msra.mxu0 0
          %1041 = vmatprep.subr.bf16.mxu0 0
          %1042 = vmatpush1.bf16.msra.mxu0 0
          %1043 = vmatprep.subr.bf16.mxu0 0
          %1044 = vmatpush1.bf16.msra.mxu0 0
          %1045 = vmatprep.subr.bf16.mxu0 0
          %1046 = vmatpush1.bf16.msra.mxu0 0
          %1047 = vmatprep.subr.bf16.mxu0 0
          %1048 = vmatpush1.bf16.msra.mxu0 0
          %1049 = vmatprep.subr.bf16.mxu0 0
          %1050 = vmatpush1.bf16.msra.mxu0 0
          %1051 = vmatprep.subr.bf16.mxu0 0
          %1052 = vmatpush1.bf16.msra.mxu0 0
          %1053 = vmatprep.mubr.bf16.mxu0 0
          %1054 = vmatmul.mubr.bf16.gmra.mrb[0].mxu0 %v1016
          %v1055 = vpop.f32.mrb[0].mxu0
          %v1056 = vadd.f32 0.0, %v1055
          %v1057 = vpop.f32.mrb[0].mxu0
          %v1058 = vpop.f32.mrb[0].mxu0
          %v1059 = vpop.f32.mrb[0].mxu0
          %1060 = vdwg.mxu0
          %v1061 = vadd.f32 %v1010, %v1056
          %1062 = vst.msk [vmem:[#allocation4] sm:$0xff] %vm820, %v1061
        $region108: #{tpu_custom_call.1} parent=91 // loop_footer
          %s827 = sadd.s32 1, %s823
        $region109: #{tpu_custom_call.1} parent=91 // loop_footer_branch
          %822 = sbr.rel target = $region105
        $region110: #{tpu_custom_call.1} parent=91 // loop_exit
          _
        %v1063 = vld [vmem:[#allocation4] sm:$0xff]
        %v1064 = vadd.f32 %v818, %v1063
        %v1065 = vld [vmem:[%s9] sm:$0x1]
        %v1067 = vlaneseq
        %v1068 = vshrl.u32 %v1067, 7
        %v1069 = vsub.s32 0, %v1068
        %v1070 = vrot.slane %v1065, %v1069
        %v1072 = vadd.f32 %v1064, %v1070
        %v1073 = vsel %vm820, %v1072, 0.0
        %1074 = vadd.xlane.f32.xlu0 %v1073
        %v1075 = vpop.xlane.xlu0 %1074
        %v1076 = vrcp.pop 32.0
        %v1077 = vmul.f32 %v1075, %v1076
        %v1078 = vsub.f32 %v1072, %v1077
        %v1079 = vmul.f32 %v1078, %v1078
        %v1080 = vsel %vm820, %v1079, 0.0
        %1081 = vadd.xlane.f32.xlu0 %v1080
        %v1082 = vpop.xlane.xlu0 %1081
        %v1083 = vmul.f32 %v1082, %v1076
        %v1084 = vadd.f32 %v1083, 1e-05
        %v1085 = vrsqrt.pop %v1084
        %v1086 = vmul.f32 %v1078, %v1085
        %v1087 = vld [vmem:[%s14] sm:$0x1]
        %v1089 = vlaneseq
        %v1090 = vshrl.u32 %v1089, 7
        %v1091 = vsub.s32 0, %v1090
        %v1092 = vrot.slane %v1087, %v1091
        %v1094 = vmul.f32 %v1086, %v1092
        %v1095 = vld [vmem:[%s15] sm:$0x1]
        %v1097 = vlaneseq
        %v1098 = vshrl.u32 %v1097, 7
        %v1099 = vsub.s32 0, %v1098
        %v1100 = vrot.slane %v1095, %v1099
        %v1102 = vadd.f32 %v1094, %v1100
        %v1103 = vpack.c.bf16 %v1102, %v1102
        %1104 = vst.msk [vmem:[#allocation4] sm:$0xff] %vm820, 0.0
        %v1105 = vld [vmem:[%s10] sm:$0xf]
        %v1106 = vld [vmem:[%s10 + $0x4] sm:$0xf]
        %v1107 = vld [vmem:[%s10 + $0x8] sm:$0xf]
        %v1108 = vld [vmem:[%s10 + $0xc] sm:$0xf]
        %v1109 = vld [vmem:[%s11] sm:$0x1]
        %v1111 = vlaneseq
        %v1112 = vshrl.u32 %v1111, 7
        %v1113 = vsub.s32 0, %v1112
        %v1114 = vrot.slane %v1109, %v1113
        %v1120 = vunpack.c.l.b16 %v1105
        %v1121 = vunpack.c.l.b16 %v1106
        %v1122 = vunpack.c.l.b16 %v1107
        %v1123 = vunpack.c.l.b16 %v1108
        %v1124 = vpack.c.b16 %v1121, %v1120
        %v1125 = vpack.c.b16 %v1123, %v1122
        %v1129 = vsel %vm820, %v1103, 0
        %1131 = vmatprep.subr.bf16.mxu0 0
        %1132 = vmatpush1.bf16.msra.mxu0 %v1124
        %1133 = vmatprep.subr.bf16.mxu0 0
        %1134 = vmatpush1.bf16.msra.mxu0 %v1125
        %1135 = vmatprep.subr.bf16.mxu0 0
        %1136 = vmatpush1.bf16.msra.mxu0 0
        %1137 = vmatprep.subr.bf16.mxu0 0
        %1138 = vmatpush1.bf16.msra.mxu0 0
        %1139 = vmatprep.subr.bf16.mxu0 0
        %1140 = vmatpush1.bf16.msra.mxu0 0
        %1141 = vmatprep.subr.bf16.mxu0 0
        %1142 = vmatpush1.bf16.msra.mxu0 0
        %1143 = vmatprep.subr.bf16.mxu0 0
        %1144 = vmatpush1.bf16.msra.mxu0 0
        %1145 = vmatprep.subr.bf16.mxu0 0
        %1146 = vmatpush1.bf16.msra.mxu0 0
        %1147 = vmatprep.subr.bf16.mxu0 0
        %1148 = vmatpush1.bf16.msra.mxu0 0
        %1149 = vmatprep.subr.bf16.mxu0 0
        %1150 = vmatpush1.bf16.msra.mxu0 0
        %1151 = vmatprep.subr.bf16.mxu0 0
        %1152 = vmatpush1.bf16.msra.mxu0 0
        %1153 = vmatprep.subr.bf16.mxu0 0
        %1154 = vmatpush1.bf16.msra.mxu0 0
        %1155 = vmatprep.subr.bf16.mxu0 0
        %1156 = vmatpush1.bf16.msra.mxu0 0
        %1157 = vmatprep.subr.bf16.mxu0 0
        %1158 = vmatpush1.bf16.msra.mxu0 0
        %1159 = vmatprep.subr.bf16.mxu0 0
        %1160 = vmatpush1.bf16.msra.mxu0 0
        %1161 = vmatprep.subr.bf16.mxu0 0
        %1162 = vmatpush1.bf16.msra.mxu0 0
        %1163 = vmatprep.mubr.bf16.mxu0 0
        %1164 = vmatmul.mubr.bf16.gmra.mrb[0].mxu0 %v1129
        %v1165 = vpop.f32.mrb[0].mxu0
        %v1166 = vadd.f32 %v1114, %v1165
        %v1167 = vpop.f32.mrb[0].mxu0
        %v1168 = vpop.f32.mrb[0].mxu0
        %v1169 = vpop.f32.mrb[0].mxu0
        %1170 = vdwg.mxu0
        %v1171 = vmax.f32 %v1166, 0.0
        %v1172 = vpack.c.bf16 %v1171, %v1171
        %v1173 = vld [vmem:[#allocation4] sm:$0xff]
        %v1174 = vld [vmem:[%s12] sm:$0xf]
        %v1175 = vld [vmem:[%s12 + $0x4] sm:$0xf]
        %v1176 = vld [vmem:[%s12 + $0x8] sm:$0xf]
        %v1177 = vld [vmem:[%s12 + $0xc] sm:$0xf]
        %v1178 = vld [vmem:[%s12 + $0x10] sm:$0xf]
        %v1179 = vld [vmem:[%s12 + $0x14] sm:$0xf]
        %v1180 = vld [vmem:[%s12 + $0x18] sm:$0xf]
        %v1181 = vld [vmem:[%s12 + $0x1c] sm:$0xf]
        %v1190 = vunpack.c.l.b16 %v1174
        %v1191 = vunpack.c.l.b16 %v1175
        %v1192 = vunpack.c.l.b16 %v1176
        %v1193 = vunpack.c.l.b16 %v1177
        %v1194 = vunpack.c.l.b16 %v1178
        %v1195 = vunpack.c.l.b16 %v1179
        %v1196 = vunpack.c.l.b16 %v1180
        %v1197 = vunpack.c.l.b16 %v1181
        %v1198 = vpack.c.b16 %v1191, %v1190
        %v1199 = vpack.c.b16 %v1193, %v1192
        %v1200 = vpack.c.b16 %v1195, %v1194
        %v1201 = vpack.c.b16 %v1197, %v1196
        %vm1206 = vcmask 523264
        %v1208 = vsel %vm1206, %v1172, 0
        %1210 = vmatprep.subr.bf16.mxu0 0
        %1211 = vmatpush1.bf16.msra.mxu0 %v1198
        %1212 = vmatprep.subr.bf16.mxu0 0
        %1213 = vmatpush1.bf16.msra.mxu0 %v1199
        %1214 = vmatprep.subr.bf16.mxu0 0
        %1215 = vmatpush1.bf16.msra.mxu0 %v1200
        %1216 = vmatprep.subr.bf16.mxu0 0
        %1217 = vmatpush1.bf16.msra.mxu0 %v1201
        %1218 = vmatprep.subr.bf16.mxu0 0
        %1219 = vmatpush1.bf16.msra.mxu0 0
        %1220 = vmatprep.subr.bf16.mxu0 0
        %1221 = vmatpush1.bf16.msra.mxu0 0
        %1222 = vmatprep.subr.bf16.mxu0 0
        %1223 = vmatpush1.bf16.msra.mxu0 0
        %1224 = vmatprep.subr.bf16.mxu0 0
        %1225 = vmatpush1.bf16.msra.mxu0 0
        %1226 = vmatprep.subr.bf16.mxu0 0
        %1227 = vmatpush1.bf16.msra.mxu0 0
        %1228 = vmatprep.subr.bf16.mxu0 0
        %1229 = vmatpush1.bf16.msra.mxu0 0
        %1230 = vmatprep.subr.bf16.mxu0 0
        %1231 = vmatpush1.bf16.msra.mxu0 0
        %1232 = vmatprep.subr.bf16.mxu0 0
        %1233 = vmatpush1.bf16.msra.mxu0 0
        %1234 = vmatprep.subr.bf16.mxu0 0
        %1235 = vmatpush1.bf16.msra.mxu0 0
        %1236 = vmatprep.subr.bf16.mxu0 0
        %1237 = vmatpush1.bf16.msra.mxu0 0
        %1238 = vmatprep.subr.bf16.mxu0 0
        %1239 = vmatpush1.bf16.msra.mxu0 0
        %1240 = vmatprep.subr.bf16.mxu0 0
        %1241 = vmatpush1.bf16.msra.mxu0 0
        %1242 = vmatprep.mubr.bf16.mxu0 0
        %1243 = vmatmul.mubr.bf16.gmra.mrb[0].mxu0 %v1208
        %v1244 = vpop.f32.mrb[0].mxu0
        %v1245 = vadd.f32 0.0, %v1244
        %v1246 = vpop.f32.mrb[0].mxu0
        %v1247 = vpop.f32.mrb[0].mxu0
        %v1248 = vpop.f32.mrb[0].mxu0
        %1249 = vdwg.mxu0
        %v1250 = vadd.f32 %v1173, %v1245
        %1251 = vst.msk [vmem:[#allocation4] sm:$0xff] %vm820, %v1250
        %v1252 = vld [vmem:[#allocation4] sm:$0xff]
        %v1253 = vld [vmem:[%s13] sm:$0x1]
        %v1255 = vlaneseq
        %v1256 = vshrl.u32 %v1255, 7
        %v1257 = vsub.s32 0, %v1256
        %v1258 = vrot.slane %v1253, %v1257
        %v1260 = vadd.f32 %v1252, %v1258
        %v1261 = vadd.f32 %v1102, %v1260
        %v1262 = vsel %vm820, %v1261, 0.0
        %1263 = vadd.xlane.f32.xlu0 %v1262
        %v1264 = vpop.xlane.xlu0 %1263
        %v1265 = vmul.f32 %v1264, %v1076
        %v1266 = vsub.f32 %v1261, %v1265
        %v1267 = vmul.f32 %v1266, %v1266
        %v1268 = vsel %vm820, %v1267, 0.0
        %1269 = vadd.xlane.f32.xlu0 %v1268
        %v1270 = vpop.xlane.xlu0 %1269
        %v1271 = vmul.f32 %v1270, %v1076
        %v1272 = vadd.f32 %v1271, 1e-05
        %v1273 = vrsqrt.pop %v1272
        %v1274 = vmul.f32 %v1266, %v1273
        %v1275 = vld [vmem:[%s16] sm:$0x1]
        %v1277 = vlaneseq
        %v1278 = vshrl.u32 %v1277, 7
        %v1279 = vsub.s32 0, %v1278
        %v1280 = vrot.slane %v1275, %v1279
        %v1282 = vmul.f32 %v1274, %v1280
        %v1283 = vld [vmem:[%s17] sm:$0x1]
        %v1285 = vlaneseq
        %v1286 = vshrl.u32 %v1285, 7
        %v1287 = vsub.s32 0, %v1286
        %v1288 = vrot.slane %v1283, %v1287
        %v1290 = vadd.f32 %v1282, %v1288
        %1291 = vst.msk [vmem:[%s605] sm:$0xff] %vm820, %v1290
        %s1292 = sand.u32 %s444, 1
        %s1293 = scalar_lea.sflag [#allocation6], %s1292
        %s1294 = sand.u32 %s444, 1
        %s1295 = smul.addr %s1294, 8
        %s1296 = scalar_lea.vmem [#allocation5], %s1295
        // Predicated region
        $region111: #{tpu_custom_call.1} parent=91 // pred_check
          %p1297 = pneg %p454
        $region112: #{tpu_custom_call.1} parent=91 // pred_check_branch
          %1299 = sbr.rel (%p1297) target = $region114
        $region113: #{tpu_custom_call.1} parent=91 // pred_region
          %s1301 = ssub.s32 128, 128
          %1302 = vsyncadd %s1293, %s1301
          %s1303 = smul.addr %s36, 2
          %s1304 = sadd.s32 %s37, %s1303
          %s1305 = smul.addr %s1304, 128
          %s1306 = scalar_lea.hbm %s18, %s1305
          %s1308 = sshll.u32 %s1296, 4
          %s1309 = int_to_ptr.vmem [resolvable:$true] %s1308
          %1311 = dma.vmem_to_hbm [thread:$0]  %s1309, 128, %s1306, %s1293
        $region114: #{tpu_custom_call.1} parent=91 // pred_fallthru
          _
      $region92: #{tpu_custom_call.1} parent=5 // pred_fallthru
        _
      %p1312 = scmp.le.s32.totalorder 2, %s27
      // Predicated region
      $region115: #{tpu_custom_call.1} parent=5 // pred_check
        %p1313 = pneg %p1312
      $region116: #{tpu_custom_call.1} parent=5 // pred_check_branch
        %1315 = sbr.rel (%p1313) target = $region118
      $region117: #{tpu_custom_call.1} parent=5 // pred_region
        %s1316 = ssub.s32 %s27, 2
        // Predicated region
        $region119: #{tpu_custom_call.1} parent=117 // pred_check
          %p1317 = pneg %p460
        $region120: #{tpu_custom_call.1} parent=117 // pred_check_branch
          %1319 = sbr.rel (%p1317) target = $region122
        $region121: #{tpu_custom_call.1} parent=117 // pred_region
          %s1320 = sand.u32 %s445, 1
          %s1321 = scalar_lea.sflag [#allocation6], %s1320
          %s1322 = sand.u32 %s445, 1
          %s1323 = smul.addr %s1322, 8
          %s1324 = scalar_lea.vmem [#allocation5], %s1323
          %1325 = dma.done %s1321, 128
        $region122: #{tpu_custom_call.1} parent=117 // pred_fallthru
          _
      $region118: #{tpu_custom_call.1} parent=5 // pred_fallthru
        _
    $region6: #{tpu_custom_call.1} parent=1 // loop_footer
      %s31 = sadd.s32 1, %s27
    $region7: #{tpu_custom_call.1} parent=1 // loop_footer_branch
      %26 = sbr.rel target = $region3
    $region8: #{tpu_custom_call.1} parent=1 // loop_exit
      _
    %1326 = vsyncpa [#allocation6], 1
    %s1327 = scalar_lea.sflag [#allocation6], 1
    %1328 = vsyncpa %s1327, 1

</llo_original>
